<compile_context>
chip_gen: v5e
topology: v5e:2x2
jax: 0.10.0
libtpu: 0.0.40
codegen_flags: <defaults>
</compile_context>

<pallas_src>
import functools

import jax
import jax.numpy as jnp
from jax.experimental import pallas as pl
from jax.experimental.pallas import tpu as pltpu


# --------------------------------------------------------------------------
# Fused kernel: one grid step = one batch element.
#   h_ref/x_ref : (1, N, T*D)    lane axis = flattened (t, d)
#   a_ref       : (N, N)         adaptive adjacency
#   wgcn_ref    : (hops+1, TD, TD)  per-hop kron(gcn_w_h^T, I_D)
#   wvh/wvx     : (TD, TD)       DLinear(decomp+time-mix+conv) folded, per half
#   wgg/wgv     : (TD, TD)       gate Linear, block-diag kron(I_T, wg_half^T)
#   b*/sc/sh    : (1, TD)        biases / BN scale / BN shift (lane-replicated)
# --------------------------------------------------------------------------
def _fused_cell_kernel(h_ref, x_ref, a_ref, wgcn_ref, wvh_ref, wvx_ref,
                       wgg_ref, wgv_ref, bgcn_ref, bval_ref, bgate_ref,
                       sc_ref, sh_ref, o_ref, *, hops):
    h = h_ref[0]                       # (N, TD)
    xt = x_ref[0]                      # (N, TD)
    a = a_ref[...]                     # (N, N)

    # ---- GCN branch: adjacency hops + per-hop time-linear, accumulated ----
    hop = h
    gcn = jnp.dot(hop, wgcn_ref[0], preferred_element_type=jnp.float32)
    for k in range(1, hops + 1):       # static unroll; hops is tiny
        hop = jnp.dot(a, hop, preferred_element_type=jnp.float32)
        gcn = gcn + jnp.dot(hop, wgcn_ref[k], preferred_element_type=jnp.float32)
    gcn = gcn + bgcn_ref[...]
    # dropout: eval-mode identity

    # ---- DLinear branch (decomp + seasonal/trend + 1x1 conv, all folded) --
    value = (jnp.dot(h, wvh_ref[...], preferred_element_type=jnp.float32)
             + jnp.dot(xt, wvx_ref[...], preferred_element_type=jnp.float32)
             + bval_ref[...])

    # ---- gate + BN(eval) + sigmoid + gated mix + residual -----------------
    gate = (jnp.dot(gcn, wgg_ref[...], preferred_element_type=jnp.float32)
            + jnp.dot(value, wgv_ref[...], preferred_element_type=jnp.float32)
            + bgate_ref[...])
    z = jax.nn.sigmoid(gate * sc_ref[...] + sh_ref[...])
    o_ref[0] = z * gcn + (1.0 - z) * value + h


# --------------------------------------------------------------------------
# Forward pass (host side = parameter-only folding + free row-major reshapes)
# --------------------------------------------------------------------------
def gcn_encoder_cell_forward(hidden, tXin, params, hops):
    B, N, T, D = hidden.shape
    TD = T * D
    f32 = jnp.float32
    eyeD = jnp.eye(D, dtype=f32)
    eyeT = jnp.eye(T, dtype=f32)

    # adaptive adjacency (parameter-only, tiny -> plain JAX)
    A = jax.nn.softmax(jax.nn.relu(params["M1"] @ params["M2"]), axis=1)  # (N, N)

    # GCN time-linear, split per hop and lifted to lane-dense kron weights
    gcn_w, gcn_b = params["gcn_w"], params["gcn_b"]          # (T, T*(hops+1)), (T,)
    wgcn = jnp.stack([jnp.kron(gcn_w[:, k * T:(k + 1) * T].T, eyeD)
                      for k in range(hops + 1)])             # (hops+1, TD, TD)
    bgcn = jnp.repeat(gcn_b, D)[None, :]                     # (1, TD)

    # DLinear: replicate-padded 3-tap moving average folded into weights:
    #   mixed = Ws @ seas + Wt @ trend = (Ws + (Wt - Ws) @ Avg) @ x
    idx = jnp.arange(T)
    avg = (jnp.abs(idx[:, None] - idx[None, :]) <= 1).astype(f32) / 3.0
    avg = avg.at[0, 0].add(1.0 / 3.0).at[T - 1, T - 1].add(1.0 / 3.0)   # (T, T)
    ws, wt, bs, bt = params["ws"], params["wt"], params["bs"], params["bt"]
    wcomb = ws + (wt - ws) @ avg                              # (T, T)
    # fold the 1x1 conv (2D -> D) on top:  kron(A,I)@kron(I,B) = kron(A,B)
    wd, bd = params["wd"], params["bd"]                       # (D, 2D), (D,)
    wvh = jnp.kron(wcomb.T, wd[:, :D].T)                      # hidden half
    wvx = jnp.kron(wcomb.T, wd[:, D:].T)                      # tXin half
    bval = (jnp.repeat(bs + bt, D) * jnp.tile(wd.sum(axis=1), T)
            + jnp.tile(bd, T))[None, :]                       # (1, TD)

    # gate Linear (2D -> D), block-diagonal over time
    wg, bg = params["wg"], params["bg"]
    wgg = jnp.kron(eyeT, wg[:, :D].T)
    wgv = jnp.kron(eyeT, wg[:, D:].T)
    bgate = jnp.tile(bg, T)[None, :]

    # BatchNorm2d (eval) folded to per-channel scale/shift
    eps = 1e-5
    scale = params["bn_gamma"] * jax.lax.rsqrt(params["bn_var"] + eps)
    shift = params["bn_beta"] - params["bn_mean"] * scale
    sc = jnp.tile(scale, T)[None, :]
    sh = jnp.tile(shift, T)[None, :]

    # free row-major reshapes to the lane-dense (t, d) view
    h2 = hidden.reshape(B, N, TD)
    x2 = tXin.reshape(B, N, TD)

    row = pl.BlockSpec((1, N, TD), lambda b: (b, 0, 0))

    def const(shape):
        return pl.BlockSpec(shape, lambda b, _n=len(shape): (0,) * _n)

    out = pl.pallas_call(
        functools.partial(_fused_cell_kernel, hops=hops),
        out_shape=jax.ShapeDtypeStruct((B, N, TD), f32),
        grid=(B,),
        in_specs=[row, row,
                  const((N, N)),
                  const((hops + 1, TD, TD)),
                  const((TD, TD)), const((TD, TD)),
                  const((TD, TD)), const((TD, TD)),
                  const((1, TD)), const((1, TD)), const((1, TD)),
                  const((1, TD)), const((1, TD))],
        out_specs=row,
        compiler_params=pltpu.CompilerParams(
            dimension_semantics=("parallel",),
            vmem_limit_bytes=32 * 1024 * 1024),
    )(h2, x2, A, wgcn, wvh, wvx, wgg, wgv, bgcn, bval, bgate, sc, sh)
    return out.reshape(B, N, T, D)


# --------------------------------------------------------------------------
# Pure-JAX reference (same reconstructed semantics) for a correctness check
# --------------------------------------------------------------------------
def reference_forward(hidden, tXin, params, hops):
    A = jax.nn.softmax(jax.nn.relu(params["M1"] @ params["M2"]), axis=1)
    Hs = [hidden]
    for _ in range(hops):
        Hs.append(jnp.einsum("nm,bmtd->bntd", A, Hs[-1]))
    Hcat = jnp.concatenate(Hs, axis=2)
    gcn = jnp.einsum("ts,bnsd->bntd", params["gcn_w"], Hcat) \
        + params["gcn_b"][None, None, :, None]
    x = jnp.concatenate([hidden, tXin], axis=3)
    xp = jnp.concatenate([x[:, :, :1], x, x[:, :, -1:]], axis=2)
    trend = (xp[:, :, :-2] + xp[:, :, 1:-1] + xp[:, :, 2:]) / 3.0
    seas = x - trend
    mixed = (jnp.einsum("ts,bnsc->bntc", params["ws"], seas)
             + jnp.einsum("ts,bnsc->bntc", params["wt"], trend)
             + (params["bs"] + params["bt"])[None, None, :, None])
    value = jnp.einsum("dc,bntc->bntd", params["wd"], mixed) + params["bd"]
    gate = jnp.einsum("dc,bntc->bntd", params["wg"],
                      jnp.concatenate([gcn, value], axis=3)) + params["bg"]
    eps = 1e-5
    scale = params["bn_gamma"] / jnp.sqrt(params["bn_var"] + eps)
    shift = params["bn_beta"] - params["bn_mean"] * scale
    z = jax.nn.sigmoid(gate * scale + shift)
    return z * gcn + (1 - z) * value + hidden


# --------------------------------------------------------------------------
# Deterministic parameter init (shapes from the module's __init__)
# --------------------------------------------------------------------------
def init_params(key, N, T, D, hops, node_emb=10):
    ks = jax.random.split(key, 8)

    def linear(k, in_f, out_f):
        kw, kb = jax.random.split(k)
        bound = 1.0 / (in_f ** 0.5)
        w = jax.random.uniform(kw, (out_f, in_f), jnp.float32, -bound, bound)
        b = jax.random.uniform(kb, (out_f,), jnp.float32, -bound, bound)
        return w, b

    S = T * (hops + 1)
    gcn_w, gcn_b = linear(ks[0], S, T)          # GCN.gcnLinear : T*(hops+1) -> T
    ws, bs = linear(ks[1], T, T)                # Seasonal_Linear
    wt, bt = linear(ks[2], T, T)                # Trend_Linear
    wd, bd = linear(ks[3], 2 * D, D)            # DmodelLinear (1x1 conv)
    wg, bg = linear(ks[4], 2 * D, D)            # gate
    M1 = jax.random.normal(ks[5], (N, node_emb), jnp.float32)   # trainMatrix1
    M2 = jax.random.normal(ks[6], (node_emb, N), jnp.float32)   # trainMatrix2
    return dict(
        M1=M1, M2=M2, gcn_w=gcn_w, gcn_b=gcn_b,
        ws=ws, bs=bs, wt=wt, bt=bt, wd=wd, bd=bd, wg=wg, bg=bg,
        bn_gamma=jnp.ones((D,), jnp.float32),
        bn_beta=jnp.zeros((D,), jnp.float32),
        bn_mean=jnp.zeros((D,), jnp.float32),
        bn_var=jnp.ones((D,), jnp.float32),
    )


if __name__ == "__main__":
    B, N, T, D, hops = 2, 8, 8, 32, 2
    key = jax.random.PRNGKey(0)
    k_h, k_x, k_p = jax.random.split(key, 3)
    hidden = jax.random.normal(k_h, (B, N, T, D), jnp.float32)
    tXin = jax.random.normal(k_x, (B, N, T, D), jnp.float32)
    params = init_params(k_p, N, T, D, hops)

    fwd = jax.jit(functools.partial(gcn_encoder_cell_forward, hops=hops))
    out = fwd(hidden, tXin, params)
    jax.block_until_ready(out)
    assert out.shape == (B, N, T, D) and out.dtype == jnp.float32

    ref = reference_forward(hidden, tXin, params, hops)
    jax.block_until_ready(ref)
    err = float(jnp.max(jnp.abs(out - ref)))
    assert err < 2e-2, err
    print("KERNEL_OK")
</pallas_src>

<mosaic_0001>
module attributes {stable_mosaic.version = 11 : i64} {
  func.func @_fused_cell_kernel(%arg0: i32, %arg1: memref<1x8x256xf32, #tpu.memory_space<vmem>>, %arg2: memref<1x8x256xf32, #tpu.memory_space<vmem>>, %arg3: memref<8x8xf32, #tpu.memory_space<vmem>>, %arg4: memref<3x256x256xf32, #tpu.memory_space<vmem>>, %arg5: memref<256x256xf32, #tpu.memory_space<vmem>>, %arg6: memref<256x256xf32, #tpu.memory_space<vmem>>, %arg7: memref<256x256xf32, #tpu.memory_space<vmem>>, %arg8: memref<256x256xf32, #tpu.memory_space<vmem>>, %arg9: memref<1x256xf32, #tpu.memory_space<vmem>>, %arg10: memref<1x256xf32, #tpu.memory_space<vmem>>, %arg11: memref<1x256xf32, #tpu.memory_space<vmem>>, %arg12: memref<1x256xf32, #tpu.memory_space<vmem>>, %arg13: memref<1x256xf32, #tpu.memory_space<vmem>>, %arg14: memref<1x8x256xf32, #tpu.memory_space<vmem>>) attributes {dimension_semantics = [#tpu.dimension_semantics<parallel>], iteration_bounds = array<i64: 2>, scalar_prefetch = 0 : i64, scratch_operands = 0 : i64, tpu.core_type = #tpu.core_type<tc>, window_params = [{transform_indices = @transform_0, window_bounds = array<i64: 1, 8, 256>}, {transform_indices = @transform_1, window_bounds = array<i64: 1, 8, 256>}, {pipeline_mode = #tpu.pipeline_mode<synchronous>, transform_indices = @transform_2, window_bounds = array<i64: 8, 8>}, {pipeline_mode = #tpu.pipeline_mode<synchronous>, transform_indices = @transform_3, window_bounds = array<i64: 3, 256, 256>}, {pipeline_mode = #tpu.pipeline_mode<synchronous>, transform_indices = @transform_4, window_bounds = array<i64: 256, 256>}, {pipeline_mode = #tpu.pipeline_mode<synchronous>, transform_indices = @transform_5, window_bounds = array<i64: 256, 256>}, {pipeline_mode = #tpu.pipeline_mode<synchronous>, transform_indices = @transform_6, window_bounds = array<i64: 256, 256>}, {pipeline_mode = #tpu.pipeline_mode<synchronous>, transform_indices = @transform_7, window_bounds = array<i64: 256, 256>}, {pipeline_mode = #tpu.pipeline_mode<synchronous>, transform_indices = @transform_8, window_bounds = array<i64: 1, 256>}, {pipeline_mode = #tpu.pipeline_mode<synchronous>, transform_indices = @transform_9, window_bounds = array<i64: 1, 256>}, {pipeline_mode = #tpu.pipeline_mode<synchronous>, transform_indices = @transform_10, window_bounds = array<i64: 1, 256>}, {pipeline_mode = #tpu.pipeline_mode<synchronous>, transform_indices = @transform_11, window_bounds = array<i64: 1, 256>}, {pipeline_mode = #tpu.pipeline_mode<synchronous>, transform_indices = @transform_12, window_bounds = array<i64: 1, 256>}, {transform_indices = @transform_13, window_bounds = array<i64: 1, 8, 256>}]} {
    %c0 = arith.constant 0 : index
    %c0_0 = arith.constant 0 : index
    %c0_1 = arith.constant 0 : index
    %0 = vector.load %arg1[%c0, %c0_0, %c0_1] : memref<1x8x256xf32, #tpu.memory_space<vmem>>, vector<1x8x256xf32>
    %1 = vector.shape_cast %0 : vector<1x8x256xf32> to vector<8x256xf32>
    %c0_2 = arith.constant 0 : index
    %c0_3 = arith.constant 0 : index
    %c0_4 = arith.constant 0 : index
    %2 = vector.load %arg2[%c0_2, %c0_3, %c0_4] : memref<1x8x256xf32, #tpu.memory_space<vmem>>, vector<1x8x256xf32>
    %3 = vector.shape_cast %2 : vector<1x8x256xf32> to vector<8x256xf32>
    %c0_5 = arith.constant 0 : index
    %c0_6 = arith.constant 0 : index
    %4 = vector.load %arg3[%c0_5, %c0_6] : memref<8x8xf32, #tpu.memory_space<vmem>>, vector<8x8xf32>
    %c0_7 = arith.constant 0 : index
    %c0_8 = arith.constant 0 : index
    %c0_9 = arith.constant 0 : index
    %5 = vector.load %arg4[%c0_7, %c0_8, %c0_9] : memref<3x256x256xf32, #tpu.memory_space<vmem>>, vector<1x256x256xf32>
    %6 = vector.shape_cast %5 : vector<1x256x256xf32> to vector<256x256xf32>
    %cst = arith.constant dense<0.000000e+00> : vector<8x256xf32>
    %7 = tpu.matmul %1, %6, %cst {dimension_numbers = #tpu.dot_dimension_numbers<[1], [0], [0], [1], [0, 0, 1, 1], [], []>} : vector<8x256xf32>, vector<256x256xf32>, vector<8x256xf32> -> vector<8x256xf32>
    %cst_10 = arith.constant dense<0.000000e+00> : vector<8x256xf32>
    %8 = tpu.matmul %4, %1, %cst_10 {dimension_numbers = #tpu.dot_dimension_numbers<[1], [0], [0], [1], [0, 0, 1, 1], [], []>} : vector<8x8xf32>, vector<8x256xf32>, vector<8x256xf32> -> vector<8x256xf32>
    %c1 = arith.constant 1 : index
    %c0_11 = arith.constant 0 : index
    %c0_12 = arith.constant 0 : index
    %9 = vector.load %arg4[%c1, %c0_11, %c0_12] : memref<3x256x256xf32, #tpu.memory_space<vmem>>, vector<1x256x256xf32>
    %10 = vector.shape_cast %9 : vector<1x256x256xf32> to vector<256x256xf32>
    %cst_13 = arith.constant dense<0.000000e+00> : vector<8x256xf32>
    %11 = tpu.matmul %8, %10, %cst_13 {dimension_numbers = #tpu.dot_dimension_numbers<[1], [0], [0], [1], [0, 0, 1, 1], [], []>} : vector<8x256xf32>, vector<256x256xf32>, vector<8x256xf32> -> vector<8x256xf32>
    %12 = arith.addf %7, %11 : vector<8x256xf32>
    %cst_14 = arith.constant dense<0.000000e+00> : vector<8x256xf32>
    %13 = tpu.matmul %4, %8, %cst_14 {dimension_numbers = #tpu.dot_dimension_numbers<[1], [0], [0], [1], [0, 0, 1, 1], [], []>} : vector<8x8xf32>, vector<8x256xf32>, vector<8x256xf32> -> vector<8x256xf32>
    %c2 = arith.constant 2 : index
    %c0_15 = arith.constant 0 : index
    %c0_16 = arith.constant 0 : index
    %14 = vector.load %arg4[%c2, %c0_15, %c0_16] : memref<3x256x256xf32, #tpu.memory_space<vmem>>, vector<1x256x256xf32>
    %15 = vector.shape_cast %14 : vector<1x256x256xf32> to vector<256x256xf32>
    %cst_17 = arith.constant dense<0.000000e+00> : vector<8x256xf32>
    %16 = tpu.matmul %13, %15, %cst_17 {dimension_numbers = #tpu.dot_dimension_numbers<[1], [0], [0], [1], [0, 0, 1, 1], [], []>} : vector<8x256xf32>, vector<256x256xf32>, vector<8x256xf32> -> vector<8x256xf32>
    %17 = arith.addf %12, %16 : vector<8x256xf32>
    %c0_18 = arith.constant 0 : index
    %c0_19 = arith.constant 0 : index
    %18 = vector.load %arg9[%c0_18, %c0_19] : memref<1x256xf32, #tpu.memory_space<vmem>>, vector<1x256xf32>
    %19 = vector.broadcast %18 : vector<1x256xf32> to vector<8x256xf32>
    %20 = arith.addf %17, %19 : vector<8x256xf32>
    %c0_20 = arith.constant 0 : index
    %c0_21 = arith.constant 0 : index
    %21 = vector.load %arg5[%c0_20, %c0_21] : memref<256x256xf32, #tpu.memory_space<vmem>>, vector<256x256xf32>
    %cst_22 = arith.constant dense<0.000000e+00> : vector<8x256xf32>
    %22 = tpu.matmul %1, %21, %cst_22 {dimension_numbers = #tpu.dot_dimension_numbers<[1], [0], [0], [1], [0, 0, 1, 1], [], []>} : vector<8x256xf32>, vector<256x256xf32>, vector<8x256xf32> -> vector<8x256xf32>
    %c0_23 = arith.constant 0 : index
    %c0_24 = arith.constant 0 : index
    %23 = vector.load %arg6[%c0_23, %c0_24] : memref<256x256xf32, #tpu.memory_space<vmem>>, vector<256x256xf32>
    %cst_25 = arith.constant dense<0.000000e+00> : vector<8x256xf32>
    %24 = tpu.matmul %3, %23, %cst_25 {dimension_numbers = #tpu.dot_dimension_numbers<[1], [0], [0], [1], [0, 0, 1, 1], [], []>} : vector<8x256xf32>, vector<256x256xf32>, vector<8x256xf32> -> vector<8x256xf32>
    %25 = arith.addf %22, %24 : vector<8x256xf32>
    %c0_26 = arith.constant 0 : index
    %c0_27 = arith.constant 0 : index
    %26 = vector.load %arg10[%c0_26, %c0_27] : memref<1x256xf32, #tpu.memory_space<vmem>>, vector<1x256xf32>
    %27 = vector.broadcast %26 : vector<1x256xf32> to vector<8x256xf32>
    %28 = arith.addf %25, %27 : vector<8x256xf32>
    %c0_28 = arith.constant 0 : index
    %c0_29 = arith.constant 0 : index
    %29 = vector.load %arg7[%c0_28, %c0_29] : memref<256x256xf32, #tpu.memory_space<vmem>>, vector<256x256xf32>
    %cst_30 = arith.constant dense<0.000000e+00> : vector<8x256xf32>
    %30 = tpu.matmul %20, %29, %cst_30 {dimension_numbers = #tpu.dot_dimension_numbers<[1], [0], [0], [1], [0, 0, 1, 1], [], []>} : vector<8x256xf32>, vector<256x256xf32>, vector<8x256xf32> -> vector<8x256xf32>
    %c0_31 = arith.constant 0 : index
    %c0_32 = arith.constant 0 : index
    %31 = vector.load %arg8[%c0_31, %c0_32] : memref<256x256xf32, #tpu.memory_space<vmem>>, vector<256x256xf32>
    %cst_33 = arith.constant dense<0.000000e+00> : vector<8x256xf32>
    %32 = tpu.matmul %28, %31, %cst_33 {dimension_numbers = #tpu.dot_dimension_numbers<[1], [0], [0], [1], [0, 0, 1, 1], [], []>} : vector<8x256xf32>, vector<256x256xf32>, vector<8x256xf32> -> vector<8x256xf32>
    %33 = arith.addf %30, %32 : vector<8x256xf32>
    %c0_34 = arith.constant 0 : index
    %c0_35 = arith.constant 0 : index
    %34 = vector.load %arg11[%c0_34, %c0_35] : memref<1x256xf32, #tpu.memory_space<vmem>>, vector<1x256xf32>
    %35 = vector.broadcast %34 : vector<1x256xf32> to vector<8x256xf32>
    %36 = arith.addf %33, %35 : vector<8x256xf32>
    %c0_36 = arith.constant 0 : index
    %c0_37 = arith.constant 0 : index
    %37 = vector.load %arg12[%c0_36, %c0_37] : memref<1x256xf32, #tpu.memory_space<vmem>>, vector<1x256xf32>
    %38 = vector.broadcast %37 : vector<1x256xf32> to vector<8x256xf32>
    %39 = arith.mulf %36, %38 : vector<8x256xf32>
    %c0_38 = arith.constant 0 : index
    %c0_39 = arith.constant 0 : index
    %40 = vector.load %arg13[%c0_38, %c0_39] : memref<1x256xf32, #tpu.memory_space<vmem>>, vector<1x256xf32>
    %41 = vector.broadcast %40 : vector<1x256xf32> to vector<8x256xf32>
    %42 = arith.addf %39, %41 : vector<8x256xf32>
    %43 = arith.negf %42 : vector<8x256xf32>
    %44 = math.exp %43 : vector<8x256xf32>
    %cst_40 = arith.constant 1.000000e+00 : f32
    %45 = vector.broadcast %cst_40 : f32 to vector<8x256xf32>
    %46 = arith.addf %45, %44 : vector<8x256xf32>
    %47 = arith.divf %45, %46 : vector<8x256xf32>
    %48 = arith.mulf %47, %20 : vector<8x256xf32>
    %cst_41 = arith.constant 1.000000e+00 : f32
    %49 = vector.broadcast %cst_41 : f32 to vector<8x256xf32>
    %50 = arith.subf %49, %47 : vector<8x256xf32>
    %51 = arith.mulf %50, %28 : vector<8x256xf32>
    %52 = arith.addf %48, %51 : vector<8x256xf32>
    %53 = arith.addf %52, %1 : vector<8x256xf32>
    %c0_42 = arith.constant 0 : index
    %c0_43 = arith.constant 0 : index
    %c0_44 = arith.constant 0 : index
    %54 = vector.load %arg14[%c0_42, %c0_43, %c0_44] : memref<1x8x256xf32, #tpu.memory_space<vmem>>, vector<1x8x256xf32>
    %55 = vector.shape_cast %54 : vector<1x8x256xf32> to vector<8x256xf32>
    %56 = vector.shape_cast %53 : vector<8x256xf32> to vector<1x8x256xf32>
    tpu.vector_store %arg14[%c0_42, %c0_43, %c0_44], %56 {strides = array<i32>} : memref<1x8x256xf32, #tpu.memory_space<vmem>>, vector<1x8x256xf32>,
    return
  }
  func.func @transform_0(%arg0: i32) -> (i32, i32, i32) {
    %c0_i32 = arith.constant 0 : i32
    %c0_i32_0 = arith.constant 0 : i32
    %c0_i32_1 = arith.constant 0 : i32
    return %arg0, %c0_i32, %c0_i32_0 : i32, i32, i32
  }
  func.func @transform_1(%arg0: i32) -> (i32, i32, i32) {
    %c0_i32 = arith.constant 0 : i32
    %c0_i32_0 = arith.constant 0 : i32
    %c0_i32_1 = arith.constant 0 : i32
    return %arg0, %c0_i32, %c0_i32_0 : i32, i32, i32
  }
  func.func @transform_2(%arg0: i32) -> (i32, i32) {
    %c0_i32 = arith.constant 0 : i32
    %c0_i32_0 = arith.constant 0 : i32
    %c0_i32_1 = arith.constant 0 : i32
    return %c0_i32, %c0_i32_0 : i32, i32
  }
  func.func @transform_3(%arg0: i32) -> (i32, i32, i32) {
    %c0_i32 = arith.constant 0 : i32
    %c0_i32_0 = arith.constant 0 : i32
    %c0_i32_1 = arith.constant 0 : i32
    %c0_i32_2 = arith.constant 0 : i32
    return %c0_i32, %c0_i32_0, %c0_i32_1 : i32, i32, i32
  }
  func.func @transform_4(%arg0: i32) -> (i32, i32) {
    %c0_i32 = arith.constant 0 : i32
    %c0_i32_0 = arith.constant 0 : i32
    %c0_i32_1 = arith.constant 0 : i32
    return %c0_i32, %c0_i32_0 : i32, i32
  }
  func.func @transform_5(%arg0: i32) -> (i32, i32) {
    %c0_i32 = arith.constant 0 : i32
    %c0_i32_0 = arith.constant 0 : i32
    %c0_i32_1 = arith.constant 0 : i32
    return %c0_i32, %c0_i32_0 : i32, i32
  }
  func.func @transform_6(%arg0: i32) -> (i32, i32) {
    %c0_i32 = arith.constant 0 : i32
    %c0_i32_0 = arith.constant 0 : i32
    %c0_i32_1 = arith.constant 0 : i32
    return %c0_i32, %c0_i32_0 : i32, i32
  }
  func.func @transform_7(%arg0: i32) -> (i32, i32) {
    %c0_i32 = arith.constant 0 : i32
    %c0_i32_0 = arith.constant 0 : i32
    %c0_i32_1 = arith.constant 0 : i32
    return %c0_i32, %c0_i32_0 : i32, i32
  }
  func.func @transform_8(%arg0: i32) -> (i32, i32) {
    %c0_i32 = arith.constant 0 : i32
    %c0_i32_0 = arith.constant 0 : i32
    %c0_i32_1 = arith.constant 0 : i32
    return %c0_i32, %c0_i32_0 : i32, i32
  }
  func.func @transform_9(%arg0: i32) -> (i32, i32) {
    %c0_i32 = arith.constant 0 : i32
    %c0_i32_0 = arith.constant 0 : i32
    %c0_i32_1 = arith.constant 0 : i32
    return %c0_i32, %c0_i32_0 : i32, i32
  }
  func.func @transform_10(%arg0: i32) -> (i32, i32) {
    %c0_i32 = arith.constant 0 : i32
    %c0_i32_0 = arith.constant 0 : i32
    %c0_i32_1 = arith.constant 0 : i32
    return %c0_i32, %c0_i32_0 : i32, i32
  }
  func.func @transform_11(%arg0: i32) -> (i32, i32) {
    %c0_i32 = arith.constant 0 : i32
    %c0_i32_0 = arith.constant 0 : i32
    %c0_i32_1 = arith.constant 0 : i32
    return %c0_i32, %c0_i32_0 : i32, i32
  }
  func.func @transform_12(%arg0: i32) -> (i32, i32) {
    %c0_i32 = arith.constant 0 : i32
    %c0_i32_0 = arith.constant 0 : i32
    %c0_i32_1 = arith.constant 0 : i32
    return %c0_i32, %c0_i32_0 : i32, i32
  }
  func.func @transform_13(%arg0: i32) -> (i32, i32, i32) {
    %c0_i32 = arith.constant 0 : i32
    %c0_i32_0 = arith.constant 0 : i32
    %c0_i32_1 = arith.constant 0 : i32
    return %arg0, %c0_i32, %c0_i32_0 : i32, i32, i32
  }
}

</mosaic_0001>

<llo_original>
// kernel: tile.43
$region0: #{tile.43}
  #allocation0 [shape = 's32[1]{0}', space=sflag, size = 0x4, scoped, tag = 'scoped memory for tile.43']
  %s0 = inlined_call_operand.vmem [shape: f32[32], index: 0, kind: input, shape index: {}]
  %s1 = inlined_call_operand.vmem [shape: f32[8,32], index: 1, kind: output, shape index: {}]
  // Predicated region
  $region2: #{tile.43} parent=0 // pred_check
    _
  $region3: #{tile.43} parent=0 // pred_check_branch
    %3 = sbr.rel (0) target = $region5
  $region4: #{tile.43} parent=0 // pred_region
    _
  $region5: #{tile.43} parent=0 // pred_fallthru
    _
  %v4 = vld [vmem:[%s0] ss:$0 sm:$0xff]
  %5 = vst [vmem:[%s1] sm:$0xff] %v4

// kernel: tile.44
$region0: #{tile.44}
  %s0 = inlined_call_operand.vmem [shape: f32[8,32], index: 0, kind: input, shape index: {}]
  %s1 = inlined_call_operand.vmem [shape: f32[1,256], index: 1, kind: output, shape index: {}]
  $region1: #{tile.44} parent=0
    #allocation0 [shape = 'u8[8192]{0}', space=vmem, size = 0x2000, scoped, tag = 'scoped mem for output reshape']
    %s2 = smov 3
    %v3 = vld [vmem:[%s0] ss:$4 sm:%s2]
    %vm4 = vcmask 261120
    %5 = vst.msk [vmem:[#allocation0] ss:$8 sm:$0x3] %vm4, %v3
    %s6 = scalar_lea.vmem %s0, 3
    %s7 = smov 3
    %v8 = vld [vmem:[%s6] ss:$4 sm:%s7]
    %9 = vrot.lane.b32.xlu0 %v8, 96
    %v10 = vpop.permute.xlu0 %9
    %vm11 = vcmask 1048320
    %12 = vst.msk [vmem:[#allocation0] ss:$8 sm:$0x3] %vm11, %v10
    %s13 = scalar_lea.vmem %s0, 2
    %s14 = smov 3
    %v15 = vld [vmem:[%s13] ss:$4 sm:%s14]
    %16 = vrot.lane.b32.xlu0 %v15, 64
    %v17 = vpop.permute.xlu0 %16
    %vm18 = vcmask 785920
    %19 = vst.msk [vmem:[#allocation0] ss:$8 sm:$0x3] %vm18, %v17
    %s20 = scalar_lea.vmem %s0, 1
    %s21 = smov 3
    %v22 = vld [vmem:[%s20] ss:$4 sm:%s21]
    %23 = vrot.lane.b32.xlu0 %v22, 32
    %v24 = vpop.permute.xlu0 %23
    %vm25 = vcmask 523520
    %26 = vst.msk [vmem:[#allocation0] ss:$8 sm:$0x3] %vm25, %v24
    %s28 = ssub.s32 2, 1
    %v29 = vld [vmem:[#allocation0] sm:%s28]
    %s31 = ssub.s32 2, 1
    %32 = vst [vmem:[%s1] sm:%s31] %v29
    %s33 = scalar_lea.vmem [#allocation0], 8
    %v34 = vld [vmem:[%s33] sm:%s28]
    %s36 = ssub.s32 2, 1
    %s37 = scalar_lea.vmem %s1, 1
    %38 = vst [vmem:[%s37] sm:%s36] %v34

// kernel: gcn_encoder_cell_forward.1
$region0: #{gcn_encoder_cell_forward.1}
  #allocation0 [shape = 'u32[]', space=smem, size = 0x4, offset = 0x4, fixed_abs, tag = 'smem constant byte address 0x4 - core index']
  #allocation1 [shape = 'u32[72,128]{1,0:T(1,128)}', space=vmem, size = 0x9000, scoped, tag = 'internal scratch']
  %s0 = inlined_call_operand.vmem [shape: f32[2,8,256], index: 0, kind: input, shape index: {}]
  %s1 = inlined_call_operand.vmem [shape: f32[2,8,256], index: 1, kind: input, shape index: {}]
  %s2 = inlined_call_operand.vmem [shape: f32[8,8], index: 2, kind: input, shape index: {}]
  %s3 = inlined_call_operand.vmem [shape: f32[3,256,256], index: 3, kind: input, shape index: {}]
  %s4 = inlined_call_operand.vmem [shape: f32[256,256], index: 4, kind: input, shape index: {}]
  %s5 = inlined_call_operand.vmem [shape: f32[256,256], index: 5, kind: input, shape index: {}]
  %s6 = inlined_call_operand.vmem [shape: f32[256,256], index: 6, kind: input, shape index: {}]
  %s7 = inlined_call_operand.vmem [shape: f32[256,256], index: 7, kind: input, shape index: {}]
  %s8 = inlined_call_operand.vmem [shape: f32[1,256], index: 8, kind: input, shape index: {}]
  %s9 = inlined_call_operand.vmem [shape: f32[1,256], index: 9, kind: input, shape index: {}]
  %s10 = inlined_call_operand.vmem [shape: f32[1,256], index: 10, kind: input, shape index: {}]
  %s11 = inlined_call_operand.vmem [shape: f32[1,256], index: 11, kind: input, shape index: {}]
  %s12 = inlined_call_operand.vmem [shape: f32[1,256], index: 12, kind: input, shape index: {}]
  %s13 = inlined_call_operand.vmem [shape: f32[2,8,256], index: 13, kind: output, shape index: {}]
  %s14 = sld [smem:[#allocation0]]
  $region85: #{gcn_encoder_cell_forward.1} parent=0
    _
  %s16 = ssub.s32 1, %s14
  %s17 = scalar_select 0, %s16, %s14
  loop: start=0, step=1, limit=4
  $region2: #{gcn_encoder_cell_forward.1} parent=0 // loop_pre_header
    _
  $region3: #{gcn_encoder_cell_forward.1} parent=0 // loop_header
    %s19 = sphi 0, %s23
    %p20 = scmp.ge.s32.totalorder %s19, 4
    %s29 = sphi 0, %s31
    %s32 = sphi 0, %s29
    %s33 = sphi 0, %s32
    %s49 = sphi 0, %s33
    %s55 = sphi 0, %s57
    %s58 = sphi 0, %s55
    %s59 = sphi 0, %s58
    %s75 = sphi 0, %s59
    %s79 = sphi 0, %s79
    %s81 = sphi 0, %s79
    %s82 = sphi 0, %s81
    %s96 = sphi 0, %s82
    %s100 = sphi 0, %s100
    %s102 = sphi 0, %s100
    %s103 = sphi 0, %s102
    %s117 = sphi 0, %s103
    %s121 = sphi 0, %s121
    %s123 = sphi 0, %s121
    %s124 = sphi 0, %s123
    %s138 = sphi 0, %s124
    %s142 = sphi 0, %s142
    %s144 = sphi 0, %s142
    %s145 = sphi 0, %s144
    %s159 = sphi 0, %s145
    %s163 = sphi 0, %s163
    %s165 = sphi 0, %s163
    %s166 = sphi 0, %s165
    %s180 = sphi 0, %s166
    %s184 = sphi 0, %s184
    %s186 = sphi 0, %s184
    %s187 = sphi 0, %s186
    %s201 = sphi 0, %s187
    %s205 = sphi 0, %s205
    %s207 = sphi 0, %s205
    %s208 = sphi 0, %s207
    %s222 = sphi 0, %s208
    %s226 = sphi 0, %s226
    %s228 = sphi 0, %s226
    %s229 = sphi 0, %s228
    %s243 = sphi 0, %s229
    %s247 = sphi 0, %s247
    %s249 = sphi 0, %s247
    %s250 = sphi 0, %s249
    %s264 = sphi 0, %s250
    %s268 = sphi 0, %s268
    %s270 = sphi 0, %s268
    %s271 = sphi 0, %s270
    %s285 = sphi 0, %s271
    %s289 = sphi 0, %s289
    %s291 = sphi 0, %s289
    %s292 = sphi 0, %s291
    %s306 = sphi 0, %s292
    %s312 = sphi 0, %s314
    %s315 = sphi 0, %s312
    %s316 = sphi 0, %s315
    %s332 = sphi 0, %s316
  $region4: #{gcn_encoder_cell_forward.1} parent=0 // loop_header_branch
    %22 = sbr.rel (%p20) target = $region8
  $region5: #{gcn_encoder_cell_forward.1} parent=0 // loop_body
    %s24 = ssub.s32 %s19, 1
    %s25 = ssub.s32 %s19, 2
    %s26 = sadd.s32 %s19, 1
    %s27 = ssub.s32 %s19, %s26
    %p28 = scmp.eq.s32.totalorder %s27, 0
    %s30 = sadd.s32 %s29, 1
    %s31 = scalar_select %p28, %s29, %s30
    %p34 = pneg %p28
    %p35 = scmp.eq.s32.totalorder %s19, 1
    %p36 = por %p34, %p35
    %p37 = scmp.ne.s32.totalorder %s29, %s32
    %p38 = scmp.eq.s32.totalorder %s19, 0
    %p39 = por %p37, %p38
    %p40 = scmp.ne.s32.totalorder %s29, %s32
    %p41 = scmp.eq.s32.totalorder %s24, 1
    %p42 = por %p40, %p41
    %p43 = scmp.ne.s32.totalorder %s32, %s33
    %p44 = scmp.eq.s32.totalorder %s24, 0
    %p45 = por %p43, %p44
    %p46 = scmp.ne.s32.totalorder %s32, %s33
    %p47 = scmp.eq.s32.totalorder %s25, 1
    %p48 = por %p46, %p47
    %p50 = scmp.ne.s32.totalorder %s33, %s49
    %p51 = scmp.eq.s32.totalorder %s25, 0
    %p52 = por %p50, %p51
    %s53 = ssub.s32 %s19, %s26
    %p54 = scmp.eq.s32.totalorder %s53, 0
    %s56 = sadd.s32 %s55, 1
    %s57 = scalar_select %p54, %s55, %s56
    %p60 = pneg %p54
    %p61 = scmp.eq.s32.totalorder %s19, 1
    %p62 = por %p60, %p61
    %p63 = scmp.ne.s32.totalorder %s55, %s58
    %p64 = scmp.eq.s32.totalorder %s19, 0
    %p65 = por %p63, %p64
    %p66 = scmp.ne.s32.totalorder %s55, %s58
    %p67 = scmp.eq.s32.totalorder %s24, 1
    %p68 = por %p66, %p67
    %p69 = scmp.ne.s32.totalorder %s58, %s59
    %p70 = scmp.eq.s32.totalorder %s24, 0
    %p71 = por %p69, %p70
    %p72 = scmp.ne.s32.totalorder %s58, %s59
    %p73 = scmp.eq.s32.totalorder %s25, 1
    %p74 = por %p72, %p73
    %p76 = scmp.ne.s32.totalorder %s59, %s75
    %p77 = scmp.eq.s32.totalorder %s25, 0
    %p78 = por %p76, %p77
    %s80 = sadd.s32 %s79, 1
    %p83 = scmp.eq.s32.totalorder %s19, 1
    %p84 = scmp.ne.s32.totalorder %s79, %s81
    %p85 = scmp.eq.s32.totalorder %s19, 0
    %p86 = por %p84, %p85
    %p87 = scmp.ne.s32.totalorder %s79, %s81
    %p88 = scmp.eq.s32.totalorder %s24, 1
    %p89 = por %p87, %p88
    %p90 = scmp.ne.s32.totalorder %s81, %s82
    %p91 = scmp.eq.s32.totalorder %s24, 0
    %p92 = por %p90, %p91
    %p93 = scmp.ne.s32.totalorder %s81, %s82
    %p94 = scmp.eq.s32.totalorder %s25, 1
    %p95 = por %p93, %p94
    %p97 = scmp.ne.s32.totalorder %s82, %s96
    %p98 = scmp.eq.s32.totalorder %s25, 0
    %p99 = por %p97, %p98
    %s101 = sadd.s32 %s100, 1
    %p104 = scmp.eq.s32.totalorder %s19, 1
    %p105 = scmp.ne.s32.totalorder %s100, %s102
    %p106 = scmp.eq.s32.totalorder %s19, 0
    %p107 = por %p105, %p106
    %p108 = scmp.ne.s32.totalorder %s100, %s102
    %p109 = scmp.eq.s32.totalorder %s24, 1
    %p110 = por %p108, %p109
    %p111 = scmp.ne.s32.totalorder %s102, %s103
    %p112 = scmp.eq.s32.totalorder %s24, 0
    %p113 = por %p111, %p112
    %p114 = scmp.ne.s32.totalorder %s102, %s103
    %p115 = scmp.eq.s32.totalorder %s25, 1
    %p116 = por %p114, %p115
    %p118 = scmp.ne.s32.totalorder %s103, %s117
    %p119 = scmp.eq.s32.totalorder %s25, 0
    %p120 = por %p118, %p119
    %s122 = sadd.s32 %s121, 1
    %p125 = scmp.eq.s32.totalorder %s19, 1
    %p126 = scmp.ne.s32.totalorder %s121, %s123
    %p127 = scmp.eq.s32.totalorder %s19, 0
    %p128 = por %p126, %p127
    %p129 = scmp.ne.s32.totalorder %s121, %s123
    %p130 = scmp.eq.s32.totalorder %s24, 1
    %p131 = por %p129, %p130
    %p132 = scmp.ne.s32.totalorder %s123, %s124
    %p133 = scmp.eq.s32.totalorder %s24, 0
    %p134 = por %p132, %p133
    %p135 = scmp.ne.s32.totalorder %s123, %s124
    %p136 = scmp.eq.s32.totalorder %s25, 1
    %p137 = por %p135, %p136
    %p139 = scmp.ne.s32.totalorder %s124, %s138
    %p140 = scmp.eq.s32.totalorder %s25, 0
    %p141 = por %p139, %p140
    %s143 = sadd.s32 %s142, 1
    %p146 = scmp.eq.s32.totalorder %s19, 1
    %p147 = scmp.ne.s32.totalorder %s142, %s144
    %p148 = scmp.eq.s32.totalorder %s19, 0
    %p149 = por %p147, %p148
    %p150 = scmp.ne.s32.totalorder %s142, %s144
    %p151 = scmp.eq.s32.totalorder %s24, 1
    %p152 = por %p150, %p151
    %p153 = scmp.ne.s32.totalorder %s144, %s145
    %p154 = scmp.eq.s32.totalorder %s24, 0
    %p155 = por %p153, %p154
    %p156 = scmp.ne.s32.totalorder %s144, %s145
    %p157 = scmp.eq.s32.totalorder %s25, 1
    %p158 = por %p156, %p157
    %p160 = scmp.ne.s32.totalorder %s145, %s159
    %p161 = scmp.eq.s32.totalorder %s25, 0
    %p162 = por %p160, %p161
    %s164 = sadd.s32 %s163, 1
    %p167 = scmp.eq.s32.totalorder %s19, 1
    %p168 = scmp.ne.s32.totalorder %s163, %s165
    %p169 = scmp.eq.s32.totalorder %s19, 0
    %p170 = por %p168, %p169
    %p171 = scmp.ne.s32.totalorder %s163, %s165
    %p172 = scmp.eq.s32.totalorder %s24, 1
    %p173 = por %p171, %p172
    %p174 = scmp.ne.s32.totalorder %s165, %s166
    %p175 = scmp.eq.s32.totalorder %s24, 0
    %p176 = por %p174, %p175
    %p177 = scmp.ne.s32.totalorder %s165, %s166
    %p178 = scmp.eq.s32.totalorder %s25, 1
    %p179 = por %p177, %p178
    %p181 = scmp.ne.s32.totalorder %s166, %s180
    %p182 = scmp.eq.s32.totalorder %s25, 0
    %p183 = por %p181, %p182
    %s185 = sadd.s32 %s184, 1
    %p188 = scmp.eq.s32.totalorder %s19, 1
    %p189 = scmp.ne.s32.totalorder %s184, %s186
    %p190 = scmp.eq.s32.totalorder %s19, 0
    %p191 = por %p189, %p190
    %p192 = scmp.ne.s32.totalorder %s184, %s186
    %p193 = scmp.eq.s32.totalorder %s24, 1
    %p194 = por %p192, %p193
    %p195 = scmp.ne.s32.totalorder %s186, %s187
    %p196 = scmp.eq.s32.totalorder %s24, 0
    %p197 = por %p195, %p196
    %p198 = scmp.ne.s32.totalorder %s186, %s187
    %p199 = scmp.eq.s32.totalorder %s25, 1
    %p200 = por %p198, %p199
    %p202 = scmp.ne.s32.totalorder %s187, %s201
    %p203 = scmp.eq.s32.totalorder %s25, 0
    %p204 = por %p202, %p203
    %s206 = sadd.s32 %s205, 1
    %p209 = scmp.eq.s32.totalorder %s19, 1
    %p210 = scmp.ne.s32.totalorder %s205, %s207
    %p211 = scmp.eq.s32.totalorder %s19, 0
    %p212 = por %p210, %p211
    %p213 = scmp.ne.s32.totalorder %s205, %s207
    %p214 = scmp.eq.s32.totalorder %s24, 1
    %p215 = por %p213, %p214
    %p216 = scmp.ne.s32.totalorder %s207, %s208
    %p217 = scmp.eq.s32.totalorder %s24, 0
    %p218 = por %p216, %p217
    %p219 = scmp.ne.s32.totalorder %s207, %s208
    %p220 = scmp.eq.s32.totalorder %s25, 1
    %p221 = por %p219, %p220
    %p223 = scmp.ne.s32.totalorder %s208, %s222
    %p224 = scmp.eq.s32.totalorder %s25, 0
    %p225 = por %p223, %p224
    %s227 = sadd.s32 %s226, 1
    %p230 = scmp.eq.s32.totalorder %s19, 1
    %p231 = scmp.ne.s32.totalorder %s226, %s228
    %p232 = scmp.eq.s32.totalorder %s19, 0
    %p233 = por %p231, %p232
    %p234 = scmp.ne.s32.totalorder %s226, %s228
    %p235 = scmp.eq.s32.totalorder %s24, 1
    %p236 = por %p234, %p235
    %p237 = scmp.ne.s32.totalorder %s228, %s229
    %p238 = scmp.eq.s32.totalorder %s24, 0
    %p239 = por %p237, %p238
    %p240 = scmp.ne.s32.totalorder %s228, %s229
    %p241 = scmp.eq.s32.totalorder %s25, 1
    %p242 = por %p240, %p241
    %p244 = scmp.ne.s32.totalorder %s229, %s243
    %p245 = scmp.eq.s32.totalorder %s25, 0
    %p246 = por %p244, %p245
    %s248 = sadd.s32 %s247, 1
    %p251 = scmp.eq.s32.totalorder %s19, 1
    %p252 = scmp.ne.s32.totalorder %s247, %s249
    %p253 = scmp.eq.s32.totalorder %s19, 0
    %p254 = por %p252, %p253
    %p255 = scmp.ne.s32.totalorder %s247, %s249
    %p256 = scmp.eq.s32.totalorder %s24, 1
    %p257 = por %p255, %p256
    %p258 = scmp.ne.s32.totalorder %s249, %s250
    %p259 = scmp.eq.s32.totalorder %s24, 0
    %p260 = por %p258, %p259
    %p261 = scmp.ne.s32.totalorder %s249, %s250
    %p262 = scmp.eq.s32.totalorder %s25, 1
    %p263 = por %p261, %p262
    %p265 = scmp.ne.s32.totalorder %s250, %s264
    %p266 = scmp.eq.s32.totalorder %s25, 0
    %p267 = por %p265, %p266
    %s269 = sadd.s32 %s268, 1
    %p272 = scmp.eq.s32.totalorder %s19, 1
    %p273 = scmp.ne.s32.totalorder %s268, %s270
    %p274 = scmp.eq.s32.totalorder %s19, 0
    %p275 = por %p273, %p274
    %p276 = scmp.ne.s32.totalorder %s268, %s270
    %p277 = scmp.eq.s32.totalorder %s24, 1
    %p278 = por %p276, %p277
    %p279 = scmp.ne.s32.totalorder %s270, %s271
    %p280 = scmp.eq.s32.totalorder %s24, 0
    %p281 = por %p279, %p280
    %p282 = scmp.ne.s32.totalorder %s270, %s271
    %p283 = scmp.eq.s32.totalorder %s25, 1
    %p284 = por %p282, %p283
    %p286 = scmp.ne.s32.totalorder %s271, %s285
    %p287 = scmp.eq.s32.totalorder %s25, 0
    %p288 = por %p286, %p287
    %s290 = sadd.s32 %s289, 1
    %p293 = scmp.eq.s32.totalorder %s19, 1
    %p294 = scmp.ne.s32.totalorder %s289, %s291
    %p295 = scmp.eq.s32.totalorder %s19, 0
    %p296 = por %p294, %p295
    %p297 = scmp.ne.s32.totalorder %s289, %s291
    %p298 = scmp.eq.s32.totalorder %s24, 1
    %p299 = por %p297, %p298
    %p300 = scmp.ne.s32.totalorder %s291, %s292
    %p301 = scmp.eq.s32.totalorder %s24, 0
    %p302 = por %p300, %p301
    %p303 = scmp.ne.s32.totalorder %s291, %s292
    %p304 = scmp.eq.s32.totalorder %s25, 1
    %p305 = por %p303, %p304
    %p307 = scmp.ne.s32.totalorder %s292, %s306
    %p308 = scmp.eq.s32.totalorder %s25, 0
    %p309 = por %p307, %p308
    %s310 = ssub.s32 %s19, %s26
    %p311 = scmp.eq.s32.totalorder %s310, 0
    %s313 = sadd.s32 %s312, 1
    %s314 = scalar_select %p311, %s312, %s313
    %p317 = pneg %p311
    %p318 = scmp.eq.s32.totalorder %s19, 1
    %p319 = por %p317, %p318
    %p320 = scmp.ne.s32.totalorder %s312, %s315
    %p321 = scmp.eq.s32.totalorder %s19, 0
    %p322 = por %p320, %p321
    %p323 = scmp.ne.s32.totalorder %s312, %s315
    %p324 = scmp.eq.s32.totalorder %s24, 1
    %p325 = por %p323, %p324
    %p326 = scmp.ne.s32.totalorder %s315, %s316
    %p327 = scmp.eq.s32.totalorder %s24, 0
    %p328 = por %p326, %p327
    %p329 = scmp.ne.s32.totalorder %s315, %s316
    %p330 = scmp.eq.s32.totalorder %s25, 1
    %p331 = por %p329, %p330
    %p333 = scmp.ne.s32.totalorder %s316, %s332
    %p334 = scmp.eq.s32.totalorder %s25, 0
    %p335 = por %p333, %p334
    %p336 = scmp.le.s32.totalorder 1, %s19
    %p337 = scmp.lt.s32.totalorder %s19, 3
    %p338 = pnand %p336, %p337
    %p339 = pneg %p338
    // Predicated region
    $region9: #{gcn_encoder_cell_forward.1} parent=5 // pred_check
      _
    $region10: #{gcn_encoder_cell_forward.1} parent=5 // pred_check_branch
      %341 = sbr.rel (%p338) target = $region12
    $region11: #{gcn_encoder_cell_forward.1} parent=5 // pred_region
      %s342 = ssub.s32 %s19, 1
      // Predicated region
      $region13: #{gcn_encoder_cell_forward.1} parent=11 // pred_check
        %p343 = pneg %p92
      $region14: #{gcn_encoder_cell_forward.1} parent=11 // pred_check_branch
        %345 = sbr.rel (%p343) target = $region16
      $region15: #{gcn_encoder_cell_forward.1} parent=11 // pred_region
        _
      $region16: #{gcn_encoder_cell_forward.1} parent=11 // pred_fallthru
        _
      // Predicated region
      $region17: #{gcn_encoder_cell_forward.1} parent=11 // pred_check
        %p346 = pneg %p113
      $region18: #{gcn_encoder_cell_forward.1} parent=11 // pred_check_branch
        %348 = sbr.rel (%p346) target = $region20
      $region19: #{gcn_encoder_cell_forward.1} parent=11 // pred_region
        _
      $region20: #{gcn_encoder_cell_forward.1} parent=11 // pred_fallthru
        _
      // Predicated region
      $region21: #{gcn_encoder_cell_forward.1} parent=11 // pred_check
        %p349 = pneg %p134
      $region22: #{gcn_encoder_cell_forward.1} parent=11 // pred_check_branch
        %351 = sbr.rel (%p349) target = $region24
      $region23: #{gcn_encoder_cell_forward.1} parent=11 // pred_region
        _
      $region24: #{gcn_encoder_cell_forward.1} parent=11 // pred_fallthru
        _
      // Predicated region
      $region25: #{gcn_encoder_cell_forward.1} parent=11 // pred_check
        %p352 = pneg %p155
      $region26: #{gcn_encoder_cell_forward.1} parent=11 // pred_check_branch
        %354 = sbr.rel (%p352) target = $region28
      $region27: #{gcn_encoder_cell_forward.1} parent=11 // pred_region
        _
      $region28: #{gcn_encoder_cell_forward.1} parent=11 // pred_fallthru
        _
      // Predicated region
      $region29: #{gcn_encoder_cell_forward.1} parent=11 // pred_check
        %p355 = pneg %p176
      $region30: #{gcn_encoder_cell_forward.1} parent=11 // pred_check_branch
        %357 = sbr.rel (%p355) target = $region32
      $region31: #{gcn_encoder_cell_forward.1} parent=11 // pred_region
        _
      $region32: #{gcn_encoder_cell_forward.1} parent=11 // pred_fallthru
        _
      // Predicated region
      $region33: #{gcn_encoder_cell_forward.1} parent=11 // pred_check
        %p358 = pneg %p197
      $region34: #{gcn_encoder_cell_forward.1} parent=11 // pred_check_branch
        %360 = sbr.rel (%p358) target = $region36
      $region35: #{gcn_encoder_cell_forward.1} parent=11 // pred_region
        _
      $region36: #{gcn_encoder_cell_forward.1} parent=11 // pred_fallthru
        _
      // Predicated region
      $region37: #{gcn_encoder_cell_forward.1} parent=11 // pred_check
        %p361 = pneg %p218
      $region38: #{gcn_encoder_cell_forward.1} parent=11 // pred_check_branch
        %363 = sbr.rel (%p361) target = $region40
      $region39: #{gcn_encoder_cell_forward.1} parent=11 // pred_region
        _
      $region40: #{gcn_encoder_cell_forward.1} parent=11 // pred_fallthru
        _
      // Predicated region
      $region41: #{gcn_encoder_cell_forward.1} parent=11 // pred_check
        %p364 = pneg %p239
      $region42: #{gcn_encoder_cell_forward.1} parent=11 // pred_check_branch
        %366 = sbr.rel (%p364) target = $region44
      $region43: #{gcn_encoder_cell_forward.1} parent=11 // pred_region
        _
      $region44: #{gcn_encoder_cell_forward.1} parent=11 // pred_fallthru
        _
      // Predicated region
      $region45: #{gcn_encoder_cell_forward.1} parent=11 // pred_check
        %p367 = pneg %p260
      $region46: #{gcn_encoder_cell_forward.1} parent=11 // pred_check_branch
        %369 = sbr.rel (%p367) target = $region48
      $region47: #{gcn_encoder_cell_forward.1} parent=11 // pred_region
        _
      $region48: #{gcn_encoder_cell_forward.1} parent=11 // pred_fallthru
        _
      // Predicated region
      $region49: #{gcn_encoder_cell_forward.1} parent=11 // pred_check
        %p370 = pneg %p281
      $region50: #{gcn_encoder_cell_forward.1} parent=11 // pred_check_branch
        %372 = sbr.rel (%p370) target = $region52
      $region51: #{gcn_encoder_cell_forward.1} parent=11 // pred_region
        _
      $region52: #{gcn_encoder_cell_forward.1} parent=11 // pred_fallthru
        _
      // Predicated region
      $region53: #{gcn_encoder_cell_forward.1} parent=11 // pred_check
        %p373 = pneg %p302
      $region54: #{gcn_encoder_cell_forward.1} parent=11 // pred_check_branch
        %375 = sbr.rel (%p373) target = $region56
      $region55: #{gcn_encoder_cell_forward.1} parent=11 // pred_region
        _
      $region56: #{gcn_encoder_cell_forward.1} parent=11 // pred_fallthru
        _
    $region12: #{gcn_encoder_cell_forward.1} parent=5 // pred_fallthru
      _
    %p376 = scmp.lt.s32.totalorder %s19, 2
    // Predicated region
    $region57: #{gcn_encoder_cell_forward.1} parent=5 // pred_check
      %p377 = pneg %p376
    $region58: #{gcn_encoder_cell_forward.1} parent=5 // pred_check_branch
      %379 = sbr.rel (%p377) target = $region60
    $region59: #{gcn_encoder_cell_forward.1} parent=5 // pred_region
      // Predicated region
      $region61: #{gcn_encoder_cell_forward.1} parent=59 // pred_check
        %p380 = pneg %p39
      $region62: #{gcn_encoder_cell_forward.1} parent=59 // pred_check_branch
        %382 = sbr.rel (%p380) target = $region64
      $region63: #{gcn_encoder_cell_forward.1} parent=59 // pred_region
        %p383 = scmp.lt.s32.totalorder %s19, 1
        %s384 = scalar_select %p383, %s19, 1
        %s385 = smul.addr %s384, 2
        %s386 = smul.addr %s385, 8
        %s387 = scalar_lea.vmem %s0, %s386
      $region64: #{gcn_encoder_cell_forward.1} parent=59 // pred_fallthru
        _
      // Predicated region
      $region65: #{gcn_encoder_cell_forward.1} parent=59 // pred_check
        %p388 = pneg %p65
      $region66: #{gcn_encoder_cell_forward.1} parent=59 // pred_check_branch
        %390 = sbr.rel (%p388) target = $region68
      $region67: #{gcn_encoder_cell_forward.1} parent=59 // pred_region
        %p391 = scmp.lt.s32.totalorder %s19, 1
        %s392 = scalar_select %p391, %s19, 1
        %s393 = smul.addr %s392, 2
        %s394 = smul.addr %s393, 8
        %s395 = scalar_lea.vmem %s1, %s394
      $region68: #{gcn_encoder_cell_forward.1} parent=59 // pred_fallthru
        _
    $region60: #{gcn_encoder_cell_forward.1} parent=5 // pred_fallthru
      _
    %p396 = scmp.le.s32.totalorder 1, %s19
    %p397 = scmp.lt.s32.totalorder %s19, 3
    %p398 = pnand %p396, %p397
    %p399 = pneg %p398
    // Predicated region
    $region69: #{gcn_encoder_cell_forward.1} parent=5 // pred_check
      _
    $region70: #{gcn_encoder_cell_forward.1} parent=5 // pred_check_branch
      %401 = sbr.rel (%p398) target = $region72
    $region71: #{gcn_encoder_cell_forward.1} parent=5 // pred_region
      %s402 = ssub.s32 %s19, 1
      %p403 = scmp.lt.s32.totalorder %s24, 1
      %s404 = scalar_select %p403, %s24, 1
      %s405 = smul.addr %s404, 2
      %s406 = smul.addr %s405, 8
      %s407 = scalar_lea.vmem %s0, %s406
      %p408 = pneg %p45
      %p409 = pneg %p42
      %p410 = scmp.lt.s32.totalorder %s24, 1
      %s411 = scalar_select %p410, %s24, 1
      %s412 = smul.addr %s411, 2
      %s413 = smul.addr %s412, 8
      %s414 = scalar_lea.vmem %s1, %s413
      %p415 = pneg %p71
      %p416 = pneg %p68
      %p417 = pneg %p92
      %p418 = pneg %p89
      %p419 = pneg %p113
      %p420 = pneg %p110
      %p421 = pneg %p134
      %p422 = pneg %p131
      %p423 = pneg %p155
      %p424 = pneg %p152
      %p425 = pneg %p176
      %p426 = pneg %p173
      %p427 = pneg %p197
      %p428 = pneg %p194
      %p429 = pneg %p218
      %p430 = pneg %p215
      %p431 = pneg %p239
      %p432 = pneg %p236
      %p433 = pneg %p260
      %p434 = pneg %p257
      %p435 = pneg %p281
      %p436 = pneg %p278
      %p437 = pneg %p302
      %p438 = pneg %p299
      %p439 = pneg %p328
      %p440 = pneg %p325
      %p441 = scmp.lt.s32.totalorder %s24, 1
      %s442 = scalar_select %p441, %s24, 1
      %s443 = smul.addr %s442, 2
      %s444 = smul.addr %s443, 8
      %s445 = scalar_lea.vmem %s13, %s444
      %p446 = scmp.lt.s32.totalorder %s24, 1
      %s447 = scalar_select %p446, %s24, 1
      %s448 = smul.addr %s447, 2
      %s449 = smul.addr %s448, 8
      %s450 = scalar_lea.vmem %s0, %s449
      %p451 = scmp.lt.s32.totalorder %s24, 1
      %s452 = scalar_select %p451, %s24, 1
      %s453 = smul.addr %s452, 2
      %s454 = smul.addr %s453, 8
      %s455 = scalar_lea.vmem %s1, %s454
      %p456 = scmp.lt.s32.totalorder %s24, 1
      %s457 = scalar_select %p456, %s24, 1
      %s458 = smul.addr %s457, 2
      %s459 = smul.addr %s458, 8
      %s460 = scalar_lea.vmem %s13, %s459
      %v461 = vld [vmem:[%s450] sm:$0xff]
      %v462 = vld [vmem:[%s450 + $0x8] sm:$0xff]
      %v463 = vld [vmem:[%s455] sm:$0xff]
      %v464 = vld [vmem:[%s455 + $0x8] sm:$0xff]
      %v465 = vld [vmem:[%s2] sm:$0xff]
      %v466 = vld [vmem:[%s3] sm:$0xff]
      %v467 = vld [vmem:[%s3 + $0x8] sm:$0xff]
      %v468 = vld [vmem:[%s3 + $0x10] sm:$0xff]
      %v469 = vld [vmem:[%s3 + $0x18] sm:$0xff]
      %v470 = vld [vmem:[%s3 + $0x20] sm:$0xff]
      %v471 = vld [vmem:[%s3 + $0x28] sm:$0xff]
      %v472 = vld [vmem:[%s3 + $0x30] sm:$0xff]
      %v473 = vld [vmem:[%s3 + $0x38] sm:$0xff]
      %v474 = vld [vmem:[%s3 + $0x40] sm:$0xff]
      %v475 = vld [vmem:[%s3 + $0x48] sm:$0xff]
      %v476 = vld [vmem:[%s3 + $0x50] sm:$0xff]
      %v477 = vld [vmem:[%s3 + $0x58] sm:$0xff]
      %v478 = vld [vmem:[%s3 + $0x60] sm:$0xff]
      %v479 = vld [vmem:[%s3 + $0x68] sm:$0xff]
      %v480 = vld [vmem:[%s3 + $0x70] sm:$0xff]
      %v481 = vld [vmem:[%s3 + $0x78] sm:$0xff]
      %v482 = vld [vmem:[%s3 + $0x80] sm:$0xff]
      %v483 = vld [vmem:[%s3 + $0x88] sm:$0xff]
      %v484 = vld [vmem:[%s3 + $0x90] sm:$0xff]
      %v485 = vld [vmem:[%s3 + $0x98] sm:$0xff]
      %v486 = vld [vmem:[%s3 + $0xa0] sm:$0xff]
      %v487 = vld [vmem:[%s3 + $0xa8] sm:$0xff]
      %v488 = vld [vmem:[%s3 + $0xb0] sm:$0xff]
      %v489 = vld [vmem:[%s3 + $0xb8] sm:$0xff]
      %v490 = vld [vmem:[%s3 + $0xc0] sm:$0xff]
      %v491 = vld [vmem:[%s3 + $0xc8] sm:$0xff]
      %v492 = vld [vmem:[%s3 + $0xd0] sm:$0xff]
      %v493 = vld [vmem:[%s3 + $0xd8] sm:$0xff]
      %v494 = vld [vmem:[%s3 + $0xe0] sm:$0xff]
      %v495 = vld [vmem:[%s3 + $0xe8] sm:$0xff]
      %v496 = vld [vmem:[%s3 + $0xf0] sm:$0xff]
      %v497 = vld [vmem:[%s3 + $0xf8] sm:$0xff]
      %v498 = vld [vmem:[%s3 + $0x100] sm:$0xff]
      %v499 = vld [vmem:[%s3 + $0x108] sm:$0xff]
      %v500 = vld [vmem:[%s3 + $0x110] sm:$0xff]
      %v501 = vld [vmem:[%s3 + $0x118] sm:$0xff]
      %v502 = vld [vmem:[%s3 + $0x120] sm:$0xff]
      %v503 = vld [vmem:[%s3 + $0x128] sm:$0xff]
      %v504 = vld [vmem:[%s3 + $0x130] sm:$0xff]
      %v505 = vld [vmem:[%s3 + $0x138] sm:$0xff]
      %v506 = vld [vmem:[%s3 + $0x140] sm:$0xff]
      %v507 = vld [vmem:[%s3 + $0x148] sm:$0xff]
      %v508 = vld [vmem:[%s3 + $0x150] sm:$0xff]
      %v509 = vld [vmem:[%s3 + $0x158] sm:$0xff]
      %v510 = vld [vmem:[%s3 + $0x160] sm:$0xff]
      %v511 = vld [vmem:[%s3 + $0x168] sm:$0xff]
      %v512 = vld [vmem:[%s3 + $0x170] sm:$0xff]
      %v513 = vld [vmem:[%s3 + $0x178] sm:$0xff]
      %v514 = vld [vmem:[%s3 + $0x180] sm:$0xff]
      %v515 = vld [vmem:[%s3 + $0x188] sm:$0xff]
      %v516 = vld [vmem:[%s3 + $0x190] sm:$0xff]
      %v517 = vld [vmem:[%s3 + $0x198] sm:$0xff]
      %v518 = vld [vmem:[%s3 + $0x1a0] sm:$0xff]
      %v519 = vld [vmem:[%s3 + $0x1a8] sm:$0xff]
      %v520 = vld [vmem:[%s3 + $0x1b0] sm:$0xff]
      %v521 = vld [vmem:[%s3 + $0x1b8] sm:$0xff]
      %v522 = vld [vmem:[%s3 + $0x1c0] sm:$0xff]
      %v523 = vld [vmem:[%s3 + $0x1c8] sm:$0xff]
      %v524 = vld [vmem:[%s3 + $0x1d0] sm:$0xff]
      %v525 = vld [vmem:[%s3 + $0x1d8] sm:$0xff]
      %v526 = vld [vmem:[%s3 + $0x1e0] sm:$0xff]
      %v527 = vld [vmem:[%s3 + $0x1e8] sm:$0xff]
      %v528 = vld [vmem:[%s3 + $0x1f0] sm:$0xff]
      %v529 = vld [vmem:[%s3 + $0x1f8] sm:$0xff]
      %vm530 = vcmask 64512
      %v532 = vsel %vm530, %v465, 0
      %534 = vmatpush.msra.mxu0 0.0
      %535 = vmatpush.msra.mxu0 0.0
      %536 = vmatpush.msra.mxu0 0.0
      %537 = vmatpush.msra.mxu0 0.0
      %538 = vmatpush.msra.mxu0 0.0
      %539 = vmatpush.msra.mxu0 0.0
      %540 = vmatpush.msra.mxu0 0.0
      %541 = vmatpush.msra.mxu0 0.0
      %542 = vmatpush.msra.mxu0 0.0
      %543 = vmatpush.msra.mxu0 0.0
      %544 = vmatpush.msra.mxu0 0.0
      %545 = vmatpush.msra.mxu0 0.0
      %546 = vmatpush.msra.mxu0 0.0
      %547 = vmatpush.msra.mxu0 0.0
      %548 = vmatpush.msra.mxu0 0.0
      %549 = vmatpush.msra.mxu0 %v461
      %550 = vmatmul.f32.gmra.mxu0 %v532
      %v551 = vpop.f32.mrf.mxu0
      %v552 = vadd.f32 0.0, %v551
      %553 = vdwg.mxu0
      %554 = vmatpush.msra.mxu0 0.0
      %555 = vmatpush.msra.mxu0 0.0
      %556 = vmatpush.msra.mxu0 0.0
      %557 = vmatpush.msra.mxu0 0.0
      %558 = vmatpush.msra.mxu0 0.0
      %559 = vmatpush.msra.mxu0 0.0
      %560 = vmatpush.msra.mxu0 0.0
      %561 = vmatpush.msra.mxu0 0.0
      %562 = vmatpush.msra.mxu0 0.0
      %563 = vmatpush.msra.mxu0 0.0
      %564 = vmatpush.msra.mxu0 0.0
      %565 = vmatpush.msra.mxu0 0.0
      %566 = vmatpush.msra.mxu0 0.0
      %567 = vmatpush.msra.mxu0 0.0
      %568 = vmatpush.msra.mxu0 0.0
      %569 = vmatpush.msra.mxu0 %v462
      %570 = vmatmul.f32.gmra.mxu0 %v532
      %v571 = vpop.f32.mrf.mxu0
      %v572 = vadd.f32 0.0, %v571
      %573 = vdwg.mxu0
      %s574 = scalar_lea.vmem %s3, 512
      %v575 = vld [vmem:[%s574] sm:$0xff]
      %v576 = vld [vmem:[%s574 + $0x8] sm:$0xff]
      %v577 = vld [vmem:[%s574 + $0x10] sm:$0xff]
      %v578 = vld [vmem:[%s574 + $0x18] sm:$0xff]
      %v579 = vld [vmem:[%s574 + $0x20] sm:$0xff]
      %v580 = vld [vmem:[%s574 + $0x28] sm:$0xff]
      %v581 = vld [vmem:[%s574 + $0x30] sm:$0xff]
      %v582 = vld [vmem:[%s574 + $0x38] sm:$0xff]
      %v583 = vld [vmem:[%s574 + $0x40] sm:$0xff]
      %v584 = vld [vmem:[%s574 + $0x48] sm:$0xff]
      %v585 = vld [vmem:[%s574 + $0x50] sm:$0xff]
      %v586 = vld [vmem:[%s574 + $0x58] sm:$0xff]
      %v587 = vld [vmem:[%s574 + $0x60] sm:$0xff]
      %v588 = vld [vmem:[%s574 + $0x68] sm:$0xff]
      %v589 = vld [vmem:[%s574 + $0x70] sm:$0xff]
      %v590 = vld [vmem:[%s574 + $0x78] sm:$0xff]
      %v591 = vld [vmem:[%s574 + $0x80] sm:$0xff]
      %v592 = vld [vmem:[%s574 + $0x88] sm:$0xff]
      %v593 = vld [vmem:[%s574 + $0x90] sm:$0xff]
      %v594 = vld [vmem:[%s574 + $0x98] sm:$0xff]
      %v595 = vld [vmem:[%s574 + $0xa0] sm:$0xff]
      %v596 = vld [vmem:[%s574 + $0xa8] sm:$0xff]
      %v597 = vld [vmem:[%s574 + $0xb0] sm:$0xff]
      %v598 = vld [vmem:[%s574 + $0xb8] sm:$0xff]
      %v599 = vld [vmem:[%s574 + $0xc0] sm:$0xff]
      %v600 = vld [vmem:[%s574 + $0xc8] sm:$0xff]
      %v601 = vld [vmem:[%s574 + $0xd0] sm:$0xff]
      %v602 = vld [vmem:[%s574 + $0xd8] sm:$0xff]
      %v603 = vld [vmem:[%s574 + $0xe0] sm:$0xff]
      %v604 = vld [vmem:[%s574 + $0xe8] sm:$0xff]
      %v605 = vld [vmem:[%s574 + $0xf0] sm:$0xff]
      %v606 = vld [vmem:[%s574 + $0xf8] sm:$0xff]
      %v607 = vld [vmem:[%s574 + $0x100] sm:$0xff]
      %v608 = vld [vmem:[%s574 + $0x108] sm:$0xff]
      %v609 = vld [vmem:[%s574 + $0x110] sm:$0xff]
      %v610 = vld [vmem:[%s574 + $0x118] sm:$0xff]
      %v611 = vld [vmem:[%s574 + $0x120] sm:$0xff]
      %v612 = vld [vmem:[%s574 + $0x128] sm:$0xff]
      %v613 = vld [vmem:[%s574 + $0x130] sm:$0xff]
      %v614 = vld [vmem:[%s574 + $0x138] sm:$0xff]
      %v615 = vld [vmem:[%s574 + $0x140] sm:$0xff]
      %v616 = vld [vmem:[%s574 + $0x148] sm:$0xff]
      %v617 = vld [vmem:[%s574 + $0x150] sm:$0xff]
      %v618 = vld [vmem:[%s574 + $0x158] sm:$0xff]
      %v619 = vld [vmem:[%s574 + $0x160] sm:$0xff]
      %v620 = vld [vmem:[%s574 + $0x168] sm:$0xff]
      %v621 = vld [vmem:[%s574 + $0x170] sm:$0xff]
      %v622 = vld [vmem:[%s574 + $0x178] sm:$0xff]
      %v623 = vld [vmem:[%s574 + $0x180] sm:$0xff]
      %v624 = vld [vmem:[%s574 + $0x188] sm:$0xff]
      %v625 = vld [vmem:[%s574 + $0x190] sm:$0xff]
      %v626 = vld [vmem:[%s574 + $0x198] sm:$0xff]
      %v627 = vld [vmem:[%s574 + $0x1a0] sm:$0xff]
      %v628 = vld [vmem:[%s574 + $0x1a8] sm:$0xff]
      %v629 = vld [vmem:[%s574 + $0x1b0] sm:$0xff]
      %v630 = vld [vmem:[%s574 + $0x1b8] sm:$0xff]
      %v631 = vld [vmem:[%s574 + $0x1c0] sm:$0xff]
      %v632 = vld [vmem:[%s574 + $0x1c8] sm:$0xff]
      %v633 = vld [vmem:[%s574 + $0x1d0] sm:$0xff]
      %v634 = vld [vmem:[%s574 + $0x1d8] sm:$0xff]
      %v635 = vld [vmem:[%s574 + $0x1e0] sm:$0xff]
      %v636 = vld [vmem:[%s574 + $0x1e8] sm:$0xff]
      %v637 = vld [vmem:[%s574 + $0x1f0] sm:$0xff]
      %v638 = vld [vmem:[%s574 + $0x1f8] sm:$0xff]
      %639 = vmatpush.msra.mxu0 %v605
      %640 = vmatpush.msra.mxu0 %v603
      %641 = vmatpush.msra.mxu0 %v601
      %642 = vmatpush.msra.mxu0 %v599
      %643 = vmatpush.msra.mxu0 %v597
      %644 = vmatpush.msra.mxu0 %v595
      %645 = vmatpush.msra.mxu0 %v593
      %646 = vmatpush.msra.mxu0 %v591
      %647 = vmatpush.msra.mxu0 %v589
      %648 = vmatpush.msra.mxu0 %v587
      %649 = vmatpush.msra.mxu0 %v585
      %650 = vmatpush.msra.mxu0 %v583
      %651 = vmatpush.msra.mxu0 %v581
      %652 = vmatpush.msra.mxu0 %v579
      %653 = vmatpush.msra.mxu0 %v577
      %654 = vmatpush.msra.mxu0 %v575
      %655 = vmatmul.f32.gmra.mxu0 %v552
      %v656 = vpop.f32.mrf.mxu0
      %v657 = vadd.f32 0.0, %v656
      %658 = vdwg.mxu0
      %659 = vmatpush.msra.mxu0 %v637
      %660 = vmatpush.msra.mxu0 %v635
      %661 = vmatpush.msra.mxu0 %v633
      %662 = vmatpush.msra.mxu0 %v631
      %663 = vmatpush.msra.mxu0 %v629
      %664 = vmatpush.msra.mxu0 %v627
      %665 = vmatpush.msra.mxu0 %v625
      %666 = vmatpush.msra.mxu0 %v623
      %667 = vmatpush.msra.mxu0 %v621
      %668 = vmatpush.msra.mxu0 %v619
      %669 = vmatpush.msra.mxu0 %v617
      %670 = vmatpush.msra.mxu0 %v615
      %671 = vmatpush.msra.mxu0 %v613
      %672 = vmatpush.msra.mxu0 %v611
      %673 = vmatpush.msra.mxu0 %v609
      %674 = vmatpush.msra.mxu0 %v607
      %675 = vmatmul.f32.gmra.mxu0 %v572
      %v676 = vpop.f32.mrf.mxu0
      %v677 = vadd.f32 %v657, %v676
      %678 = vdwg.mxu0
      %679 = vmatpush.msra.mxu0 %v606
      %680 = vmatpush.msra.mxu0 %v604
      %681 = vmatpush.msra.mxu0 %v602
      %682 = vmatpush.msra.mxu0 %v600
      %683 = vmatpush.msra.mxu0 %v598
      %684 = vmatpush.msra.mxu0 %v596
      %685 = vmatpush.msra.mxu0 %v594
      %686 = vmatpush.msra.mxu0 %v592
      %687 = vmatpush.msra.mxu0 %v590
      %688 = vmatpush.msra.mxu0 %v588
      %689 = vmatpush.msra.mxu0 %v586
      %690 = vmatpush.msra.mxu0 %v584
      %691 = vmatpush.msra.mxu0 %v582
      %692 = vmatpush.msra.mxu0 %v580
      %693 = vmatpush.msra.mxu0 %v578
      %694 = vmatpush.msra.mxu0 %v576
      %695 = vmatmul.f32.gmra.mxu0 %v552
      %v696 = vpop.f32.mrf.mxu0
      %v697 = vadd.f32 0.0, %v696
      %698 = vdwg.mxu0
      %699 = vmatpush.msra.mxu0 %v638
      %700 = vmatpush.msra.mxu0 %v636
      %701 = vmatpush.msra.mxu0 %v634
      %702 = vmatpush.msra.mxu0 %v632
      %703 = vmatpush.msra.mxu0 %v630
      %704 = vmatpush.msra.mxu0 %v628
      %705 = vmatpush.msra.mxu0 %v626
      %706 = vmatpush.msra.mxu0 %v624
      %707 = vmatpush.msra.mxu0 %v622
      %708 = vmatpush.msra.mxu0 %v620
      %709 = vmatpush.msra.mxu0 %v618
      %710 = vmatpush.msra.mxu0 %v616
      %711 = vmatpush.msra.mxu0 %v614
      %712 = vmatpush.msra.mxu0 %v612
      %713 = vmatpush.msra.mxu0 %v610
      %714 = vmatpush.msra.mxu0 %v608
      %715 = vmatmul.f32.gmra.mxu0 %v572
      %v716 = vpop.f32.mrf.mxu0
      %v717 = vadd.f32 %v697, %v716
      %718 = vdwg.mxu0
      %719 = vmatpush.msra.mxu0 %v496
      %720 = vmatpush.msra.mxu0 %v494
      %721 = vmatpush.msra.mxu0 %v492
      %722 = vmatpush.msra.mxu0 %v490
      %723 = vmatpush.msra.mxu0 %v488
      %724 = vmatpush.msra.mxu0 %v486
      %725 = vmatpush.msra.mxu0 %v484
      %726 = vmatpush.msra.mxu0 %v482
      %727 = vmatpush.msra.mxu0 %v480
      %728 = vmatpush.msra.mxu0 %v478
      %729 = vmatpush.msra.mxu0 %v476
      %730 = vmatpush.msra.mxu0 %v474
      %731 = vmatpush.msra.mxu0 %v472
      %732 = vmatpush.msra.mxu0 %v470
      %733 = vmatpush.msra.mxu0 %v468
      %734 = vmatpush.msra.mxu0 %v466
      %735 = vmatmul.f32.gmra.mxu0 %v461
      %v736 = vpop.f32.mrf.mxu0
      %v737 = vadd.f32 %v677, %v736
      %738 = vdwg.mxu0
      %739 = vmatpush.msra.mxu0 %v528
      %740 = vmatpush.msra.mxu0 %v526
      %741 = vmatpush.msra.mxu0 %v524
      %742 = vmatpush.msra.mxu0 %v522
      %743 = vmatpush.msra.mxu0 %v520
      %744 = vmatpush.msra.mxu0 %v518
      %745 = vmatpush.msra.mxu0 %v516
      %746 = vmatpush.msra.mxu0 %v514
      %747 = vmatpush.msra.mxu0 %v512
      %748 = vmatpush.msra.mxu0 %v510
      %749 = vmatpush.msra.mxu0 %v508
      %750 = vmatpush.msra.mxu0 %v506
      %751 = vmatpush.msra.mxu0 %v504
      %752 = vmatpush.msra.mxu0 %v502
      %753 = vmatpush.msra.mxu0 %v500
      %754 = vmatpush.msra.mxu0 %v498
      %755 = vmatmul.f32.gmra.mxu0 %v462
      %v756 = vpop.f32.mrf.mxu0
      %v757 = vadd.f32 %v737, %v756
      %758 = vdwg.mxu0
      %759 = vmatpush.msra.mxu0 %v497
      %760 = vmatpush.msra.mxu0 %v495
      %761 = vmatpush.msra.mxu0 %v493
      %762 = vmatpush.msra.mxu0 %v491
      %763 = vmatpush.msra.mxu0 %v489
      %764 = vmatpush.msra.mxu0 %v487
      %765 = vmatpush.msra.mxu0 %v485
      %766 = vmatpush.msra.mxu0 %v483
      %767 = vmatpush.msra.mxu0 %v481
      %768 = vmatpush.msra.mxu0 %v479
      %769 = vmatpush.msra.mxu0 %v477
      %770 = vmatpush.msra.mxu0 %v475
      %771 = vmatpush.msra.mxu0 %v473
      %772 = vmatpush.msra.mxu0 %v471
      %773 = vmatpush.msra.mxu0 %v469
      %774 = vmatpush.msra.mxu0 %v467
      %775 = vmatmul.f32.gmra.mxu0 %v461
      %v776 = vpop.f32.mrf.mxu0
      %v777 = vadd.f32 %v717, %v776
      %778 = vdwg.mxu0
      %779 = vmatpush.msra.mxu0 %v529
      %780 = vmatpush.msra.mxu0 %v527
      %781 = vmatpush.msra.mxu0 %v525
      %782 = vmatpush.msra.mxu0 %v523
      %783 = vmatpush.msra.mxu0 %v521
      %784 = vmatpush.msra.mxu0 %v519
      %785 = vmatpush.msra.mxu0 %v517
      %786 = vmatpush.msra.mxu0 %v515
      %787 = vmatpush.msra.mxu0 %v513
      %788 = vmatpush.msra.mxu0 %v511
      %789 = vmatpush.msra.mxu0 %v509
      %790 = vmatpush.msra.mxu0 %v507
      %791 = vmatpush.msra.mxu0 %v505
      %792 = vmatpush.msra.mxu0 %v503
      %793 = vmatpush.msra.mxu0 %v501
      %794 = vmatpush.msra.mxu0 %v499
      %795 = vmatmul.f32.gmra.mxu0 %v462
      %v796 = vpop.f32.mrf.mxu0
      %v797 = vadd.f32 %v777, %v796
      %798 = vdwg.mxu0
      %799 = vmatpush.msra.mxu0 0.0
      %800 = vmatpush.msra.mxu0 0.0
      %801 = vmatpush.msra.mxu0 0.0
      %802 = vmatpush.msra.mxu0 0.0
      %803 = vmatpush.msra.mxu0 0.0
      %804 = vmatpush.msra.mxu0 0.0
      %805 = vmatpush.msra.mxu0 0.0
      %806 = vmatpush.msra.mxu0 0.0
      %807 = vmatpush.msra.mxu0 0.0
      %808 = vmatpush.msra.mxu0 0.0
      %809 = vmatpush.msra.mxu0 0.0
      %810 = vmatpush.msra.mxu0 0.0
      %811 = vmatpush.msra.mxu0 0.0
      %812 = vmatpush.msra.mxu0 0.0
      %813 = vmatpush.msra.mxu0 0.0
      %814 = vmatpush.msra.mxu0 %v552
      %815 = vmatmul.f32.gmra.mxu0 %v532
      %v816 = vpop.f32.mrf.mxu0
      %v817 = vadd.f32 0.0, %v816
      %818 = vdwg.mxu0
      %819 = vmatpush.msra.mxu0 0.0
      %820 = vmatpush.msra.mxu0 0.0
      %821 = vmatpush.msra.mxu0 0.0
      %822 = vmatpush.msra.mxu0 0.0
      %823 = vmatpush.msra.mxu0 0.0
      %824 = vmatpush.msra.mxu0 0.0
      %825 = vmatpush.msra.mxu0 0.0
      %826 = vmatpush.msra.mxu0 0.0
      %827 = vmatpush.msra.mxu0 0.0
      %828 = vmatpush.msra.mxu0 0.0
      %829 = vmatpush.msra.mxu0 0.0
      %830 = vmatpush.msra.mxu0 0.0
      %831 = vmatpush.msra.mxu0 0.0
      %832 = vmatpush.msra.mxu0 0.0
      %833 = vmatpush.msra.mxu0 0.0
      %834 = vmatpush.msra.mxu0 %v572
      %835 = vmatmul.f32.gmra.mxu0 %v532
      %v836 = vpop.f32.mrf.mxu0
      %v837 = vadd.f32 0.0, %v836
      %838 = vdwg.mxu0
      %s839 = scalar_lea.vmem %s3, 1024
      %v840 = vld [vmem:[%s839] sm:$0xff]
      %v841 = vld [vmem:[%s839 + $0x8] sm:$0xff]
      %v842 = vld [vmem:[%s839 + $0x10] sm:$0xff]
      %v843 = vld [vmem:[%s839 + $0x18] sm:$0xff]
      %v844 = vld [vmem:[%s839 + $0x20] sm:$0xff]
      %v845 = vld [vmem:[%s839 + $0x28] sm:$0xff]
      %v846 = vld [vmem:[%s839 + $0x30] sm:$0xff]
      %v847 = vld [vmem:[%s839 + $0x38] sm:$0xff]
      %v848 = vld [vmem:[%s839 + $0x40] sm:$0xff]
      %v849 = vld [vmem:[%s839 + $0x48] sm:$0xff]
      %v850 = vld [vmem:[%s839 + $0x50] sm:$0xff]
      %v851 = vld [vmem:[%s839 + $0x58] sm:$0xff]
      %v852 = vld [vmem:[%s839 + $0x60] sm:$0xff]
      %v853 = vld [vmem:[%s839 + $0x68] sm:$0xff]
      %v854 = vld [vmem:[%s839 + $0x70] sm:$0xff]
      %v855 = vld [vmem:[%s839 + $0x78] sm:$0xff]
      %v856 = vld [vmem:[%s839 + $0x80] sm:$0xff]
      %v857 = vld [vmem:[%s839 + $0x88] sm:$0xff]
      %v858 = vld [vmem:[%s839 + $0x90] sm:$0xff]
      %v859 = vld [vmem:[%s839 + $0x98] sm:$0xff]
      %v860 = vld [vmem:[%s839 + $0xa0] sm:$0xff]
      %v861 = vld [vmem:[%s839 + $0xa8] sm:$0xff]
      %v862 = vld [vmem:[%s839 + $0xb0] sm:$0xff]
      %v863 = vld [vmem:[%s839 + $0xb8] sm:$0xff]
      %v864 = vld [vmem:[%s839 + $0xc0] sm:$0xff]
      %v865 = vld [vmem:[%s839 + $0xc8] sm:$0xff]
      %v866 = vld [vmem:[%s839 + $0xd0] sm:$0xff]
      %v867 = vld [vmem:[%s839 + $0xd8] sm:$0xff]
      %v868 = vld [vmem:[%s839 + $0xe0] sm:$0xff]
      %v869 = vld [vmem:[%s839 + $0xe8] sm:$0xff]
      %v870 = vld [vmem:[%s839 + $0xf0] sm:$0xff]
      %v871 = vld [vmem:[%s839 + $0xf8] sm:$0xff]
      %v872 = vld [vmem:[%s839 + $0x100] sm:$0xff]
      %v873 = vld [vmem:[%s839 + $0x108] sm:$0xff]
      %v874 = vld [vmem:[%s839 + $0x110] sm:$0xff]
      %v875 = vld [vmem:[%s839 + $0x118] sm:$0xff]
      %v876 = vld [vmem:[%s839 + $0x120] sm:$0xff]
      %v877 = vld [vmem:[%s839 + $0x128] sm:$0xff]
      %v878 = vld [vmem:[%s839 + $0x130] sm:$0xff]
      %v879 = vld [vmem:[%s839 + $0x138] sm:$0xff]
      %v880 = vld [vmem:[%s839 + $0x140] sm:$0xff]
      %v881 = vld [vmem:[%s839 + $0x148] sm:$0xff]
      %v882 = vld [vmem:[%s839 + $0x150] sm:$0xff]
      %v883 = vld [vmem:[%s839 + $0x158] sm:$0xff]
      %v884 = vld [vmem:[%s839 + $0x160] sm:$0xff]
      %v885 = vld [vmem:[%s839 + $0x168] sm:$0xff]
      %v886 = vld [vmem:[%s839 + $0x170] sm:$0xff]
      %v887 = vld [vmem:[%s839 + $0x178] sm:$0xff]
      %v888 = vld [vmem:[%s839 + $0x180] sm:$0xff]
      %v889 = vld [vmem:[%s839 + $0x188] sm:$0xff]
      %v890 = vld [vmem:[%s839 + $0x190] sm:$0xff]
      %v891 = vld [vmem:[%s839 + $0x198] sm:$0xff]
      %v892 = vld [vmem:[%s839 + $0x1a0] sm:$0xff]
      %v893 = vld [vmem:[%s839 + $0x1a8] sm:$0xff]
      %v894 = vld [vmem:[%s839 + $0x1b0] sm:$0xff]
      %v895 = vld [vmem:[%s839 + $0x1b8] sm:$0xff]
      %v896 = vld [vmem:[%s839 + $0x1c0] sm:$0xff]
      %v897 = vld [vmem:[%s839 + $0x1c8] sm:$0xff]
      %v898 = vld [vmem:[%s839 + $0x1d0] sm:$0xff]
      %v899 = vld [vmem:[%s839 + $0x1d8] sm:$0xff]
      %v900 = vld [vmem:[%s839 + $0x1e0] sm:$0xff]
      %v901 = vld [vmem:[%s839 + $0x1e8] sm:$0xff]
      %v902 = vld [vmem:[%s839 + $0x1f0] sm:$0xff]
      %v903 = vld [vmem:[%s839 + $0x1f8] sm:$0xff]
      %904 = vmatpush.msra.mxu0 %v870
      %905 = vmatpush.msra.mxu0 %v868
      %906 = vmatpush.msra.mxu0 %v866
      %907 = vmatpush.msra.mxu0 %v864
      %908 = vmatpush.msra.mxu0 %v862
      %909 = vmatpush.msra.mxu0 %v860
      %910 = vmatpush.msra.mxu0 %v858
      %911 = vmatpush.msra.mxu0 %v856
      %912 = vmatpush.msra.mxu0 %v854
      %913 = vmatpush.msra.mxu0 %v852
      %914 = vmatpush.msra.mxu0 %v850
      %915 = vmatpush.msra.mxu0 %v848
      %916 = vmatpush.msra.mxu0 %v846
      %917 = vmatpush.msra.mxu0 %v844
      %918 = vmatpush.msra.mxu0 %v842
      %919 = vmatpush.msra.mxu0 %v840
      %920 = vmatmul.f32.gmra.mxu0 %v817
      %v921 = vpop.f32.mrf.mxu0
      %v922 = vadd.f32 0.0, %v921
      %923 = vdwg.mxu0
      %924 = vmatpush.msra.mxu0 %v902
      %925 = vmatpush.msra.mxu0 %v900
      %926 = vmatpush.msra.mxu0 %v898
      %927 = vmatpush.msra.mxu0 %v896
      %928 = vmatpush.msra.mxu0 %v894
      %929 = vmatpush.msra.mxu0 %v892
      %930 = vmatpush.msra.mxu0 %v890
      %931 = vmatpush.msra.mxu0 %v888
      %932 = vmatpush.msra.mxu0 %v886
      %933 = vmatpush.msra.mxu0 %v884
      %934 = vmatpush.msra.mxu0 %v882
      %935 = vmatpush.msra.mxu0 %v880
      %936 = vmatpush.msra.mxu0 %v878
      %937 = vmatpush.msra.mxu0 %v876
      %938 = vmatpush.msra.mxu0 %v874
      %939 = vmatpush.msra.mxu0 %v872
      %940 = vmatmul.f32.gmra.mxu0 %v837
      %v941 = vpop.f32.mrf.mxu0
      %v942 = vadd.f32 %v922, %v941
      %943 = vdwg.mxu0
      %944 = vmatpush.msra.mxu0 %v871
      %945 = vmatpush.msra.mxu0 %v869
      %946 = vmatpush.msra.mxu0 %v867
      %947 = vmatpush.msra.mxu0 %v865
      %948 = vmatpush.msra.mxu0 %v863
      %949 = vmatpush.msra.mxu0 %v861
      %950 = vmatpush.msra.mxu0 %v859
      %951 = vmatpush.msra.mxu0 %v857
      %952 = vmatpush.msra.mxu0 %v855
      %953 = vmatpush.msra.mxu0 %v853
      %954 = vmatpush.msra.mxu0 %v851
      %955 = vmatpush.msra.mxu0 %v849
      %956 = vmatpush.msra.mxu0 %v847
      %957 = vmatpush.msra.mxu0 %v845
      %958 = vmatpush.msra.mxu0 %v843
      %959 = vmatpush.msra.mxu0 %v841
      %960 = vmatmul.f32.gmra.mxu0 %v817
      %v961 = vpop.f32.mrf.mxu0
      %v962 = vadd.f32 0.0, %v961
      %963 = vdwg.mxu0
      %964 = vmatpush.msra.mxu0 %v903
      %965 = vmatpush.msra.mxu0 %v901
      %966 = vmatpush.msra.mxu0 %v899
      %967 = vmatpush.msra.mxu0 %v897
      %968 = vmatpush.msra.mxu0 %v895
      %969 = vmatpush.msra.mxu0 %v893
      %970 = vmatpush.msra.mxu0 %v891
      %971 = vmatpush.msra.mxu0 %v889
      %972 = vmatpush.msra.mxu0 %v887
      %973 = vmatpush.msra.mxu0 %v885
      %974 = vmatpush.msra.mxu0 %v883
      %975 = vmatpush.msra.mxu0 %v881
      %976 = vmatpush.msra.mxu0 %v879
      %977 = vmatpush.msra.mxu0 %v877
      %978 = vmatpush.msra.mxu0 %v875
      %979 = vmatpush.msra.mxu0 %v873
      %980 = vmatmul.f32.gmra.mxu0 %v837
      %v981 = vpop.f32.mrf.mxu0
      %v982 = vadd.f32 %v962, %v981
      %983 = vdwg.mxu0
      %v984 = vadd.f32 %v757, %v942
      %v985 = vadd.f32 %v797, %v982
      %v986 = vld [vmem:[%s8] sm:$0x3]
      %v988 = vperm.slane %v986, 0
      %v989 = vperm.slane %v986, 1
      %v992 = vadd.f32 %v984, %v988
      %v993 = vadd.f32 %v985, %v989
      %v994 = vld [vmem:[%s4] sm:$0xff]
      %v995 = vld [vmem:[%s4 + $0x8] sm:$0xff]
      %v996 = vld [vmem:[%s4 + $0x10] sm:$0xff]
      %v997 = vld [vmem:[%s4 + $0x18] sm:$0xff]
      %v998 = vld [vmem:[%s4 + $0x20] sm:$0xff]
      %v999 = vld [vmem:[%s4 + $0x28] sm:$0xff]
      %v1000 = vld [vmem:[%s4 + $0x30] sm:$0xff]
      %v1001 = vld [vmem:[%s4 + $0x38] sm:$0xff]
      %v1002 = vld [vmem:[%s4 + $0x40] sm:$0xff]
      %v1003 = vld [vmem:[%s4 + $0x48] sm:$0xff]
      %v1004 = vld [vmem:[%s4 + $0x50] sm:$0xff]
      %v1005 = vld [vmem:[%s4 + $0x58] sm:$0xff]
      %v1006 = vld [vmem:[%s4 + $0x60] sm:$0xff]
      %v1007 = vld [vmem:[%s4 + $0x68] sm:$0xff]
      %v1008 = vld [vmem:[%s4 + $0x70] sm:$0xff]
      %v1009 = vld [vmem:[%s4 + $0x78] sm:$0xff]
      %v1010 = vld [vmem:[%s4 + $0x80] sm:$0xff]
      %v1011 = vld [vmem:[%s4 + $0x88] sm:$0xff]
      %v1012 = vld [vmem:[%s4 + $0x90] sm:$0xff]
      %v1013 = vld [vmem:[%s4 + $0x98] sm:$0xff]
      %v1014 = vld [vmem:[%s4 + $0xa0] sm:$0xff]
      %v1015 = vld [vmem:[%s4 + $0xa8] sm:$0xff]
      %v1016 = vld [vmem:[%s4 + $0xb0] sm:$0xff]
      %v1017 = vld [vmem:[%s4 + $0xb8] sm:$0xff]
      %v1018 = vld [vmem:[%s4 + $0xc0] sm:$0xff]
      %v1019 = vld [vmem:[%s4 + $0xc8] sm:$0xff]
      %v1020 = vld [vmem:[%s4 + $0xd0] sm:$0xff]
      %v1021 = vld [vmem:[%s4 + $0xd8] sm:$0xff]
      %v1022 = vld [vmem:[%s4 + $0xe0] sm:$0xff]
      %v1023 = vld [vmem:[%s4 + $0xe8] sm:$0xff]
      %v1024 = vld [vmem:[%s4 + $0xf0] sm:$0xff]
      %v1025 = vld [vmem:[%s4 + $0xf8] sm:$0xff]
      %v1026 = vld [vmem:[%s4 + $0x100] sm:$0xff]
      %v1027 = vld [vmem:[%s4 + $0x108] sm:$0xff]
      %v1028 = vld [vmem:[%s4 + $0x110] sm:$0xff]
      %v1029 = vld [vmem:[%s4 + $0x118] sm:$0xff]
      %v1030 = vld [vmem:[%s4 + $0x120] sm:$0xff]
      %v1031 = vld [vmem:[%s4 + $0x128] sm:$0xff]
      %v1032 = vld [vmem:[%s4 + $0x130] sm:$0xff]
      %v1033 = vld [vmem:[%s4 + $0x138] sm:$0xff]
      %v1034 = vld [vmem:[%s4 + $0x140] sm:$0xff]
      %v1035 = vld [vmem:[%s4 + $0x148] sm:$0xff]
      %v1036 = vld [vmem:[%s4 + $0x150] sm:$0xff]
      %v1037 = vld [vmem:[%s4 + $0x158] sm:$0xff]
      %v1038 = vld [vmem:[%s4 + $0x160] sm:$0xff]
      %v1039 = vld [vmem:[%s4 + $0x168] sm:$0xff]
      %v1040 = vld [vmem:[%s4 + $0x170] sm:$0xff]
      %v1041 = vld [vmem:[%s4 + $0x178] sm:$0xff]
      %v1042 = vld [vmem:[%s4 + $0x180] sm:$0xff]
      %v1043 = vld [vmem:[%s4 + $0x188] sm:$0xff]
      %v1044 = vld [vmem:[%s4 + $0x190] sm:$0xff]
      %v1045 = vld [vmem:[%s4 + $0x198] sm:$0xff]
      %v1046 = vld [vmem:[%s4 + $0x1a0] sm:$0xff]
      %v1047 = vld [vmem:[%s4 + $0x1a8] sm:$0xff]
      %v1048 = vld [vmem:[%s4 + $0x1b0] sm:$0xff]
      %v1049 = vld [vmem:[%s4 + $0x1b8] sm:$0xff]
      %v1050 = vld [vmem:[%s4 + $0x1c0] sm:$0xff]
      %v1051 = vld [vmem:[%s4 + $0x1c8] sm:$0xff]
      %v1052 = vld [vmem:[%s4 + $0x1d0] sm:$0xff]
      %v1053 = vld [vmem:[%s4 + $0x1d8] sm:$0xff]
      %v1054 = vld [vmem:[%s4 + $0x1e0] sm:$0xff]
      %v1055 = vld [vmem:[%s4 + $0x1e8] sm:$0xff]
      %v1056 = vld [vmem:[%s4 + $0x1f0] sm:$0xff]
      %v1057 = vld [vmem:[%s4 + $0x1f8] sm:$0xff]
      %v1058 = vld [vmem:[%s5] sm:$0xff]
      %v1059 = vld [vmem:[%s5 + $0x8] sm:$0xff]
      %v1060 = vld [vmem:[%s5 + $0x10] sm:$0xff]
      %v1061 = vld [vmem:[%s5 + $0x18] sm:$0xff]
      %v1062 = vld [vmem:[%s5 + $0x20] sm:$0xff]
      %v1063 = vld [vmem:[%s5 + $0x28] sm:$0xff]
      %v1064 = vld [vmem:[%s5 + $0x30] sm:$0xff]
      %v1065 = vld [vmem:[%s5 + $0x38] sm:$0xff]
      %v1066 = vld [vmem:[%s5 + $0x40] sm:$0xff]
      %v1067 = vld [vmem:[%s5 + $0x48] sm:$0xff]
      %v1068 = vld [vmem:[%s5 + $0x50] sm:$0xff]
      %v1069 = vld [vmem:[%s5 + $0x58] sm:$0xff]
      %v1070 = vld [vmem:[%s5 + $0x60] sm:$0xff]
      %v1071 = vld [vmem:[%s5 + $0x68] sm:$0xff]
      %v1072 = vld [vmem:[%s5 + $0x70] sm:$0xff]
      %v1073 = vld [vmem:[%s5 + $0x78] sm:$0xff]
      %v1074 = vld [vmem:[%s5 + $0x80] sm:$0xff]
      %v1075 = vld [vmem:[%s5 + $0x88] sm:$0xff]
      %v1076 = vld [vmem:[%s5 + $0x90] sm:$0xff]
      %v1077 = vld [vmem:[%s5 + $0x98] sm:$0xff]
      %v1078 = vld [vmem:[%s5 + $0xa0] sm:$0xff]
      %v1079 = vld [vmem:[%s5 + $0xa8] sm:$0xff]
      %v1080 = vld [vmem:[%s5 + $0xb0] sm:$0xff]
      %v1081 = vld [vmem:[%s5 + $0xb8] sm:$0xff]
      %v1082 = vld [vmem:[%s5 + $0xc0] sm:$0xff]
      %v1083 = vld [vmem:[%s5 + $0xc8] sm:$0xff]
      %v1084 = vld [vmem:[%s5 + $0xd0] sm:$0xff]
      %v1085 = vld [vmem:[%s5 + $0xd8] sm:$0xff]
      %v1086 = vld [vmem:[%s5 + $0xe0] sm:$0xff]
      %v1087 = vld [vmem:[%s5 + $0xe8] sm:$0xff]
      %v1088 = vld [vmem:[%s5 + $0xf0] sm:$0xff]
      %v1089 = vld [vmem:[%s5 + $0xf8] sm:$0xff]
      %v1090 = vld [vmem:[%s5 + $0x100] sm:$0xff]
      %v1091 = vld [vmem:[%s5 + $0x108] sm:$0xff]
      %v1092 = vld [vmem:[%s5 + $0x110] sm:$0xff]
      %v1093 = vld [vmem:[%s5 + $0x118] sm:$0xff]
      %v1094 = vld [vmem:[%s5 + $0x120] sm:$0xff]
      %v1095 = vld [vmem:[%s5 + $0x128] sm:$0xff]
      %v1096 = vld [vmem:[%s5 + $0x130] sm:$0xff]
      %v1097 = vld [vmem:[%s5 + $0x138] sm:$0xff]
      %v1098 = vld [vmem:[%s5 + $0x140] sm:$0xff]
      %v1099 = vld [vmem:[%s5 + $0x148] sm:$0xff]
      %v1100 = vld [vmem:[%s5 + $0x150] sm:$0xff]
      %v1101 = vld [vmem:[%s5 + $0x158] sm:$0xff]
      %v1102 = vld [vmem:[%s5 + $0x160] sm:$0xff]
      %v1103 = vld [vmem:[%s5 + $0x168] sm:$0xff]
      %v1104 = vld [vmem:[%s5 + $0x170] sm:$0xff]
      %v1105 = vld [vmem:[%s5 + $0x178] sm:$0xff]
      %v1106 = vld [vmem:[%s5 + $0x180] sm:$0xff]
      %v1107 = vld [vmem:[%s5 + $0x188] sm:$0xff]
      %v1108 = vld [vmem:[%s5 + $0x190] sm:$0xff]
      %v1109 = vld [vmem:[%s5 + $0x198] sm:$0xff]
      %v1110 = vld [vmem:[%s5 + $0x1a0] sm:$0xff]
      %v1111 = vld [vmem:[%s5 + $0x1a8] sm:$0xff]
      %v1112 = vld [vmem:[%s5 + $0x1b0] sm:$0xff]
      %v1113 = vld [vmem:[%s5 + $0x1b8] sm:$0xff]
      %v1114 = vld [vmem:[%s5 + $0x1c0] sm:$0xff]
      %v1115 = vld [vmem:[%s5 + $0x1c8] sm:$0xff]
      %v1116 = vld [vmem:[%s5 + $0x1d0] sm:$0xff]
      %v1117 = vld [vmem:[%s5 + $0x1d8] sm:$0xff]
      %v1118 = vld [vmem:[%s5 + $0x1e0] sm:$0xff]
      %v1119 = vld [vmem:[%s5 + $0x1e8] sm:$0xff]
      %v1120 = vld [vmem:[%s5 + $0x1f0] sm:$0xff]
      %v1121 = vld [vmem:[%s5 + $0x1f8] sm:$0xff]
      %1122 = vmatpush.msra.mxu0 %v1088
      %1123 = vmatpush.msra.mxu0 %v1086
      %1124 = vmatpush.msra.mxu0 %v1084
      %1125 = vmatpush.msra.mxu0 %v1082
      %1126 = vmatpush.msra.mxu0 %v1080
      %1127 = vmatpush.msra.mxu0 %v1078
      %1128 = vmatpush.msra.mxu0 %v1076
      %1129 = vmatpush.msra.mxu0 %v1074
      %1130 = vmatpush.msra.mxu0 %v1072
      %1131 = vmatpush.msra.mxu0 %v1070
      %1132 = vmatpush.msra.mxu0 %v1068
      %1133 = vmatpush.msra.mxu0 %v1066
      %1134 = vmatpush.msra.mxu0 %v1064
      %1135 = vmatpush.msra.mxu0 %v1062
      %1136 = vmatpush.msra.mxu0 %v1060
      %1137 = vmatpush.msra.mxu0 %v1058
      %1138 = vmatmul.f32.gmra.mxu0 %v463
      %v1139 = vpop.f32.mrf.mxu0
      %v1140 = vadd.f32 0.0, %v1139
      %1141 = vdwg.mxu0
      %1142 = vmatpush.msra.mxu0 %v1120
      %1143 = vmatpush.msra.mxu0 %v1118
      %1144 = vmatpush.msra.mxu0 %v1116
      %1145 = vmatpush.msra.mxu0 %v1114
      %1146 = vmatpush.msra.mxu0 %v1112
      %1147 = vmatpush.msra.mxu0 %v1110
      %1148 = vmatpush.msra.mxu0 %v1108
      %1149 = vmatpush.msra.mxu0 %v1106
      %1150 = vmatpush.msra.mxu0 %v1104
      %1151 = vmatpush.msra.mxu0 %v1102
      %1152 = vmatpush.msra.mxu0 %v1100
      %1153 = vmatpush.msra.mxu0 %v1098
      %1154 = vmatpush.msra.mxu0 %v1096
      %1155 = vmatpush.msra.mxu0 %v1094
      %1156 = vmatpush.msra.mxu0 %v1092
      %1157 = vmatpush.msra.mxu0 %v1090
      %1158 = vmatmul.f32.gmra.mxu0 %v464
      %v1159 = vpop.f32.mrf.mxu0
      %v1160 = vadd.f32 %v1140, %v1159
      %1161 = vdwg.mxu0
      %1162 = vmatpush.msra.mxu0 %v1089
      %1163 = vmatpush.msra.mxu0 %v1087
      %1164 = vmatpush.msra.mxu0 %v1085
      %1165 = vmatpush.msra.mxu0 %v1083
      %1166 = vmatpush.msra.mxu0 %v1081
      %1167 = vmatpush.msra.mxu0 %v1079
      %1168 = vmatpush.msra.mxu0 %v1077
      %1169 = vmatpush.msra.mxu0 %v1075
      %1170 = vmatpush.msra.mxu0 %v1073
      %1171 = vmatpush.msra.mxu0 %v1071
      %1172 = vmatpush.msra.mxu0 %v1069
      %1173 = vmatpush.msra.mxu0 %v1067
      %1174 = vmatpush.msra.mxu0 %v1065
      %1175 = vmatpush.msra.mxu0 %v1063
      %1176 = vmatpush.msra.mxu0 %v1061
      %1177 = vmatpush.msra.mxu0 %v1059
      %1178 = vmatmul.f32.gmra.mxu0 %v463
      %v1179 = vpop.f32.mrf.mxu0
      %v1180 = vadd.f32 0.0, %v1179
      %1181 = vdwg.mxu0
      %1182 = vmatpush.msra.mxu0 %v1121
      %1183 = vmatpush.msra.mxu0 %v1119
      %1184 = vmatpush.msra.mxu0 %v1117
      %1185 = vmatpush.msra.mxu0 %v1115
      %1186 = vmatpush.msra.mxu0 %v1113
      %1187 = vmatpush.msra.mxu0 %v1111
      %1188 = vmatpush.msra.mxu0 %v1109
      %1189 = vmatpush.msra.mxu0 %v1107
      %1190 = vmatpush.msra.mxu0 %v1105
      %1191 = vmatpush.msra.mxu0 %v1103
      %1192 = vmatpush.msra.mxu0 %v1101
      %1193 = vmatpush.msra.mxu0 %v1099
      %1194 = vmatpush.msra.mxu0 %v1097
      %1195 = vmatpush.msra.mxu0 %v1095
      %1196 = vmatpush.msra.mxu0 %v1093
      %1197 = vmatpush.msra.mxu0 %v1091
      %1198 = vmatmul.f32.gmra.mxu0 %v464
      %v1199 = vpop.f32.mrf.mxu0
      %v1200 = vadd.f32 %v1180, %v1199
      %1201 = vdwg.mxu0
      %1202 = vmatpush.msra.mxu0 %v1024
      %1203 = vmatpush.msra.mxu0 %v1022
      %1204 = vmatpush.msra.mxu0 %v1020
      %1205 = vmatpush.msra.mxu0 %v1018
      %1206 = vmatpush.msra.mxu0 %v1016
      %1207 = vmatpush.msra.mxu0 %v1014
      %1208 = vmatpush.msra.mxu0 %v1012
      %1209 = vmatpush.msra.mxu0 %v1010
      %1210 = vmatpush.msra.mxu0 %v1008
      %1211 = vmatpush.msra.mxu0 %v1006
      %1212 = vmatpush.msra.mxu0 %v1004
      %1213 = vmatpush.msra.mxu0 %v1002
      %1214 = vmatpush.msra.mxu0 %v1000
      %1215 = vmatpush.msra.mxu0 %v998
      %1216 = vmatpush.msra.mxu0 %v996
      %1217 = vmatpush.msra.mxu0 %v994
      %1218 = vmatmul.f32.gmra.mxu0 %v461
      %v1219 = vpop.f32.mrf.mxu0
      %v1220 = vadd.f32 %v1160, %v1219
      %1221 = vdwg.mxu0
      %1222 = vmatpush.msra.mxu0 %v1056
      %1223 = vmatpush.msra.mxu0 %v1054
      %1224 = vmatpush.msra.mxu0 %v1052
      %1225 = vmatpush.msra.mxu0 %v1050
      %1226 = vmatpush.msra.mxu0 %v1048
      %1227 = vmatpush.msra.mxu0 %v1046
      %1228 = vmatpush.msra.mxu0 %v1044
      %1229 = vmatpush.msra.mxu0 %v1042
      %1230 = vmatpush.msra.mxu0 %v1040
      %1231 = vmatpush.msra.mxu0 %v1038
      %1232 = vmatpush.msra.mxu0 %v1036
      %1233 = vmatpush.msra.mxu0 %v1034
      %1234 = vmatpush.msra.mxu0 %v1032
      %1235 = vmatpush.msra.mxu0 %v1030
      %1236 = vmatpush.msra.mxu0 %v1028
      %1237 = vmatpush.msra.mxu0 %v1026
      %1238 = vmatmul.f32.gmra.mxu0 %v462
      %v1239 = vpop.f32.mrf.mxu0
      %v1240 = vadd.f32 %v1220, %v1239
      %1241 = vdwg.mxu0
      %1242 = vmatpush.msra.mxu0 %v1025
      %1243 = vmatpush.msra.mxu0 %v1023
      %1244 = vmatpush.msra.mxu0 %v1021
      %1245 = vmatpush.msra.mxu0 %v1019
      %1246 = vmatpush.msra.mxu0 %v1017
      %1247 = vmatpush.msra.mxu0 %v1015
      %1248 = vmatpush.msra.mxu0 %v1013
      %1249 = vmatpush.msra.mxu0 %v1011
      %1250 = vmatpush.msra.mxu0 %v1009
      %1251 = vmatpush.msra.mxu0 %v1007
      %1252 = vmatpush.msra.mxu0 %v1005
      %1253 = vmatpush.msra.mxu0 %v1003
      %1254 = vmatpush.msra.mxu0 %v1001
      %1255 = vmatpush.msra.mxu0 %v999
      %1256 = vmatpush.msra.mxu0 %v997
      %1257 = vmatpush.msra.mxu0 %v995
      %1258 = vmatmul.f32.gmra.mxu0 %v461
      %v1259 = vpop.f32.mrf.mxu0
      %v1260 = vadd.f32 %v1200, %v1259
      %1261 = vdwg.mxu0
      %1262 = vmatpush.msra.mxu0 %v1057
      %1263 = vmatpush.msra.mxu0 %v1055
      %1264 = vmatpush.msra.mxu0 %v1053
      %1265 = vmatpush.msra.mxu0 %v1051
      %1266 = vmatpush.msra.mxu0 %v1049
      %1267 = vmatpush.msra.mxu0 %v1047
      %1268 = vmatpush.msra.mxu0 %v1045
      %1269 = vmatpush.msra.mxu0 %v1043
      %1270 = vmatpush.msra.mxu0 %v1041
      %1271 = vmatpush.msra.mxu0 %v1039
      %1272 = vmatpush.msra.mxu0 %v1037
      %1273 = vmatpush.msra.mxu0 %v1035
      %1274 = vmatpush.msra.mxu0 %v1033
      %1275 = vmatpush.msra.mxu0 %v1031
      %1276 = vmatpush.msra.mxu0 %v1029
      %1277 = vmatpush.msra.mxu0 %v1027
      %1278 = vmatmul.f32.gmra.mxu0 %v462
      %v1279 = vpop.f32.mrf.mxu0
      %v1280 = vadd.f32 %v1260, %v1279
      %1281 = vdwg.mxu0
      %v1282 = vld [vmem:[%s9] sm:$0x3]
      %v1284 = vperm.slane %v1282, 0
      %v1285 = vperm.slane %v1282, 1
      %v1288 = vadd.f32 %v1240, %v1284
      %v1289 = vadd.f32 %v1280, %v1285
      %v1290 = vld [vmem:[%s6] sm:$0xff]
      %v1291 = vld [vmem:[%s6 + $0x8] sm:$0xff]
      %v1292 = vld [vmem:[%s6 + $0x10] sm:$0xff]
      %v1293 = vld [vmem:[%s6 + $0x18] sm:$0xff]
      %v1294 = vld [vmem:[%s6 + $0x20] sm:$0xff]
      %v1295 = vld [vmem:[%s6 + $0x28] sm:$0xff]
      %v1296 = vld [vmem:[%s6 + $0x30] sm:$0xff]
      %v1297 = vld [vmem:[%s6 + $0x38] sm:$0xff]
      %v1298 = vld [vmem:[%s6 + $0x40] sm:$0xff]
      %v1299 = vld [vmem:[%s6 + $0x48] sm:$0xff]
      %v1300 = vld [vmem:[%s6 + $0x50] sm:$0xff]
      %v1301 = vld [vmem:[%s6 + $0x58] sm:$0xff]
      %v1302 = vld [vmem:[%s6 + $0x60] sm:$0xff]
      %v1303 = vld [vmem:[%s6 + $0x68] sm:$0xff]
      %v1304 = vld [vmem:[%s6 + $0x70] sm:$0xff]
      %v1305 = vld [vmem:[%s6 + $0x78] sm:$0xff]
      %v1306 = vld [vmem:[%s6 + $0x80] sm:$0xff]
      %v1307 = vld [vmem:[%s6 + $0x88] sm:$0xff]
      %v1308 = vld [vmem:[%s6 + $0x90] sm:$0xff]
      %v1309 = vld [vmem:[%s6 + $0x98] sm:$0xff]
      %v1310 = vld [vmem:[%s6 + $0xa0] sm:$0xff]
      %v1311 = vld [vmem:[%s6 + $0xa8] sm:$0xff]
      %v1312 = vld [vmem:[%s6 + $0xb0] sm:$0xff]
      %v1313 = vld [vmem:[%s6 + $0xb8] sm:$0xff]
      %v1314 = vld [vmem:[%s6 + $0xc0] sm:$0xff]
      %v1315 = vld [vmem:[%s6 + $0xc8] sm:$0xff]
      %v1316 = vld [vmem:[%s6 + $0xd0] sm:$0xff]
      %v1317 = vld [vmem:[%s6 + $0xd8] sm:$0xff]
      %v1318 = vld [vmem:[%s6 + $0xe0] sm:$0xff]
      %v1319 = vld [vmem:[%s6 + $0xe8] sm:$0xff]
      %v1320 = vld [vmem:[%s6 + $0xf0] sm:$0xff]
      %v1321 = vld [vmem:[%s6 + $0xf8] sm:$0xff]
      %v1322 = vld [vmem:[%s6 + $0x100] sm:$0xff]
      %v1323 = vld [vmem:[%s6 + $0x108] sm:$0xff]
      %v1324 = vld [vmem:[%s6 + $0x110] sm:$0xff]
      %v1325 = vld [vmem:[%s6 + $0x118] sm:$0xff]
      %v1326 = vld [vmem:[%s6 + $0x120] sm:$0xff]
      %v1327 = vld [vmem:[%s6 + $0x128] sm:$0xff]
      %v1328 = vld [vmem:[%s6 + $0x130] sm:$0xff]
      %v1329 = vld [vmem:[%s6 + $0x138] sm:$0xff]
      %v1330 = vld [vmem:[%s6 + $0x140] sm:$0xff]
      %v1331 = vld [vmem:[%s6 + $0x148] sm:$0xff]
      %v1332 = vld [vmem:[%s6 + $0x150] sm:$0xff]
      %v1333 = vld [vmem:[%s6 + $0x158] sm:$0xff]
      %v1334 = vld [vmem:[%s6 + $0x160] sm:$0xff]
      %v1335 = vld [vmem:[%s6 + $0x168] sm:$0xff]
      %v1336 = vld [vmem:[%s6 + $0x170] sm:$0xff]
      %v1337 = vld [vmem:[%s6 + $0x178] sm:$0xff]
      %v1338 = vld [vmem:[%s6 + $0x180] sm:$0xff]
      %v1339 = vld [vmem:[%s6 + $0x188] sm:$0xff]
      %v1340 = vld [vmem:[%s6 + $0x190] sm:$0xff]
      %v1341 = vld [vmem:[%s6 + $0x198] sm:$0xff]
      %v1342 = vld [vmem:[%s6 + $0x1a0] sm:$0xff]
      %v1343 = vld [vmem:[%s6 + $0x1a8] sm:$0xff]
      %v1344 = vld [vmem:[%s6 + $0x1b0] sm:$0xff]
      %v1345 = vld [vmem:[%s6 + $0x1b8] sm:$0xff]
      %v1346 = vld [vmem:[%s6 + $0x1c0] sm:$0xff]
      %v1347 = vld [vmem:[%s6 + $0x1c8] sm:$0xff]
      %v1348 = vld [vmem:[%s6 + $0x1d0] sm:$0xff]
      %v1349 = vld [vmem:[%s6 + $0x1d8] sm:$0xff]
      %v1350 = vld [vmem:[%s6 + $0x1e0] sm:$0xff]
      %v1351 = vld [vmem:[%s6 + $0x1e8] sm:$0xff]
      %v1352 = vld [vmem:[%s6 + $0x1f0] sm:$0xff]
      %v1353 = vld [vmem:[%s6 + $0x1f8] sm:$0xff]
      %v1354 = vld [vmem:[%s7] sm:$0xff]
      %v1355 = vld [vmem:[%s7 + $0x8] sm:$0xff]
      %v1356 = vld [vmem:[%s7 + $0x10] sm:$0xff]
      %v1357 = vld [vmem:[%s7 + $0x18] sm:$0xff]
      %v1358 = vld [vmem:[%s7 + $0x20] sm:$0xff]
      %v1359 = vld [vmem:[%s7 + $0x28] sm:$0xff]
      %v1360 = vld [vmem:[%s7 + $0x30] sm:$0xff]
      %v1361 = vld [vmem:[%s7 + $0x38] sm:$0xff]
      %v1362 = vld [vmem:[%s7 + $0x40] sm:$0xff]
      %v1363 = vld [vmem:[%s7 + $0x48] sm:$0xff]
      %v1364 = vld [vmem:[%s7 + $0x50] sm:$0xff]
      %v1365 = vld [vmem:[%s7 + $0x58] sm:$0xff]
      %v1366 = vld [vmem:[%s7 + $0x60] sm:$0xff]
      %v1367 = vld [vmem:[%s7 + $0x68] sm:$0xff]
      %v1368 = vld [vmem:[%s7 + $0x70] sm:$0xff]
      %v1369 = vld [vmem:[%s7 + $0x78] sm:$0xff]
      %v1370 = vld [vmem:[%s7 + $0x80] sm:$0xff]
      %v1371 = vld [vmem:[%s7 + $0x88] sm:$0xff]
      %v1372 = vld [vmem:[%s7 + $0x90] sm:$0xff]
      %v1373 = vld [vmem:[%s7 + $0x98] sm:$0xff]
      %v1374 = vld [vmem:[%s7 + $0xa0] sm:$0xff]
      %v1375 = vld [vmem:[%s7 + $0xa8] sm:$0xff]
      %v1376 = vld [vmem:[%s7 + $0xb0] sm:$0xff]
      %v1377 = vld [vmem:[%s7 + $0xb8] sm:$0xff]
      %v1378 = vld [vmem:[%s7 + $0xc0] sm:$0xff]
      %v1379 = vld [vmem:[%s7 + $0xc8] sm:$0xff]
      %v1380 = vld [vmem:[%s7 + $0xd0] sm:$0xff]
      %v1381 = vld [vmem:[%s7 + $0xd8] sm:$0xff]
      %v1382 = vld [vmem:[%s7 + $0xe0] sm:$0xff]
      %v1383 = vld [vmem:[%s7 + $0xe8] sm:$0xff]
      %v1384 = vld [vmem:[%s7 + $0xf0] sm:$0xff]
      %v1385 = vld [vmem:[%s7 + $0xf8] sm:$0xff]
      %v1386 = vld [vmem:[%s7 + $0x100] sm:$0xff]
      %v1387 = vld [vmem:[%s7 + $0x108] sm:$0xff]
      %v1388 = vld [vmem:[%s7 + $0x110] sm:$0xff]
      %v1389 = vld [vmem:[%s7 + $0x118] sm:$0xff]
      %v1390 = vld [vmem:[%s7 + $0x120] sm:$0xff]
      %v1391 = vld [vmem:[%s7 + $0x128] sm:$0xff]
      %v1392 = vld [vmem:[%s7 + $0x130] sm:$0xff]
      %v1393 = vld [vmem:[%s7 + $0x138] sm:$0xff]
      %v1394 = vld [vmem:[%s7 + $0x140] sm:$0xff]
      %v1395 = vld [vmem:[%s7 + $0x148] sm:$0xff]
      %v1396 = vld [vmem:[%s7 + $0x150] sm:$0xff]
      %v1397 = vld [vmem:[%s7 + $0x158] sm:$0xff]
      %v1398 = vld [vmem:[%s7 + $0x160] sm:$0xff]
      %v1399 = vld [vmem:[%s7 + $0x168] sm:$0xff]
      %v1400 = vld [vmem:[%s7 + $0x170] sm:$0xff]
      %v1401 = vld [vmem:[%s7 + $0x178] sm:$0xff]
      %v1402 = vld [vmem:[%s7 + $0x180] sm:$0xff]
      %v1403 = vld [vmem:[%s7 + $0x188] sm:$0xff]
      %v1404 = vld [vmem:[%s7 + $0x190] sm:$0xff]
      %v1405 = vld [vmem:[%s7 + $0x198] sm:$0xff]
      %v1406 = vld [vmem:[%s7 + $0x1a0] sm:$0xff]
      %v1407 = vld [vmem:[%s7 + $0x1a8] sm:$0xff]
      %v1408 = vld [vmem:[%s7 + $0x1b0] sm:$0xff]
      %v1409 = vld [vmem:[%s7 + $0x1b8] sm:$0xff]
      %v1410 = vld [vmem:[%s7 + $0x1c0] sm:$0xff]
      %v1411 = vld [vmem:[%s7 + $0x1c8] sm:$0xff]
      %v1412 = vld [vmem:[%s7 + $0x1d0] sm:$0xff]
      %v1413 = vld [vmem:[%s7 + $0x1d8] sm:$0xff]
      %v1414 = vld [vmem:[%s7 + $0x1e0] sm:$0xff]
      %v1415 = vld [vmem:[%s7 + $0x1e8] sm:$0xff]
      %v1416 = vld [vmem:[%s7 + $0x1f0] sm:$0xff]
      %v1417 = vld [vmem:[%s7 + $0x1f8] sm:$0xff]
      %1418 = vmatpush.msra.mxu0 %v1384
      %1419 = vmatpush.msra.mxu0 %v1382
      %1420 = vmatpush.msra.mxu0 %v1380
      %1421 = vmatpush.msra.mxu0 %v1378
      %1422 = vmatpush.msra.mxu0 %v1376
      %1423 = vmatpush.msra.mxu0 %v1374
      %1424 = vmatpush.msra.mxu0 %v1372
      %1425 = vmatpush.msra.mxu0 %v1370
      %1426 = vmatpush.msra.mxu0 %v1368
      %1427 = vmatpush.msra.mxu0 %v1366
      %1428 = vmatpush.msra.mxu0 %v1364
      %1429 = vmatpush.msra.mxu0 %v1362
      %1430 = vmatpush.msra.mxu0 %v1360
      %1431 = vmatpush.msra.mxu0 %v1358
      %1432 = vmatpush.msra.mxu0 %v1356
      %1433 = vmatpush.msra.mxu0 %v1354
      %1434 = vmatmul.f32.gmra.mxu0 %v1288
      %v1435 = vpop.f32.mrf.mxu0
      %v1436 = vadd.f32 0.0, %v1435
      %1437 = vdwg.mxu0
      %1438 = vmatpush.msra.mxu0 %v1416
      %1439 = vmatpush.msra.mxu0 %v1414
      %1440 = vmatpush.msra.mxu0 %v1412
      %1441 = vmatpush.msra.mxu0 %v1410
      %1442 = vmatpush.msra.mxu0 %v1408
      %1443 = vmatpush.msra.mxu0 %v1406
      %1444 = vmatpush.msra.mxu0 %v1404
      %1445 = vmatpush.msra.mxu0 %v1402
      %1446 = vmatpush.msra.mxu0 %v1400
      %1447 = vmatpush.msra.mxu0 %v1398
      %1448 = vmatpush.msra.mxu0 %v1396
      %1449 = vmatpush.msra.mxu0 %v1394
      %1450 = vmatpush.msra.mxu0 %v1392
      %1451 = vmatpush.msra.mxu0 %v1390
      %1452 = vmatpush.msra.mxu0 %v1388
      %1453 = vmatpush.msra.mxu0 %v1386
      %1454 = vmatmul.f32.gmra.mxu0 %v1289
      %v1455 = vpop.f32.mrf.mxu0
      %v1456 = vadd.f32 %v1436, %v1455
      %1457 = vdwg.mxu0
      %1458 = vmatpush.msra.mxu0 %v1385
      %1459 = vmatpush.msra.mxu0 %v1383
      %1460 = vmatpush.msra.mxu0 %v1381
      %1461 = vmatpush.msra.mxu0 %v1379
      %1462 = vmatpush.msra.mxu0 %v1377
      %1463 = vmatpush.msra.mxu0 %v1375
      %1464 = vmatpush.msra.mxu0 %v1373
      %1465 = vmatpush.msra.mxu0 %v1371
      %1466 = vmatpush.msra.mxu0 %v1369
      %1467 = vmatpush.msra.mxu0 %v1367
      %1468 = vmatpush.msra.mxu0 %v1365
      %1469 = vmatpush.msra.mxu0 %v1363
      %1470 = vmatpush.msra.mxu0 %v1361
      %1471 = vmatpush.msra.mxu0 %v1359
      %1472 = vmatpush.msra.mxu0 %v1357
      %1473 = vmatpush.msra.mxu0 %v1355
      %1474 = vmatmul.f32.gmra.mxu0 %v1288
      %v1475 = vpop.f32.mrf.mxu0
      %v1476 = vadd.f32 0.0, %v1475
      %1477 = vdwg.mxu0
      %1478 = vmatpush.msra.mxu0 %v1417
      %1479 = vmatpush.msra.mxu0 %v1415
      %1480 = vmatpush.msra.mxu0 %v1413
      %1481 = vmatpush.msra.mxu0 %v1411
      %1482 = vmatpush.msra.mxu0 %v1409
      %1483 = vmatpush.msra.mxu0 %v1407
      %1484 = vmatpush.msra.mxu0 %v1405
      %1485 = vmatpush.msra.mxu0 %v1403
      %1486 = vmatpush.msra.mxu0 %v1401
      %1487 = vmatpush.msra.mxu0 %v1399
      %1488 = vmatpush.msra.mxu0 %v1397
      %1489 = vmatpush.msra.mxu0 %v1395
      %1490 = vmatpush.msra.mxu0 %v1393
      %1491 = vmatpush.msra.mxu0 %v1391
      %1492 = vmatpush.msra.mxu0 %v1389
      %1493 = vmatpush.msra.mxu0 %v1387
      %1494 = vmatmul.f32.gmra.mxu0 %v1289
      %v1495 = vpop.f32.mrf.mxu0
      %v1496 = vadd.f32 %v1476, %v1495
      %1497 = vdwg.mxu0
      %1498 = vmatpush.msra.mxu0 %v1320
      %1499 = vmatpush.msra.mxu0 %v1318
      %1500 = vmatpush.msra.mxu0 %v1316
      %1501 = vmatpush.msra.mxu0 %v1314
      %1502 = vmatpush.msra.mxu0 %v1312
      %1503 = vmatpush.msra.mxu0 %v1310
      %1504 = vmatpush.msra.mxu0 %v1308
      %1505 = vmatpush.msra.mxu0 %v1306
      %1506 = vmatpush.msra.mxu0 %v1304
      %1507 = vmatpush.msra.mxu0 %v1302
      %1508 = vmatpush.msra.mxu0 %v1300
      %1509 = vmatpush.msra.mxu0 %v1298
      %1510 = vmatpush.msra.mxu0 %v1296
      %1511 = vmatpush.msra.mxu0 %v1294
      %1512 = vmatpush.msra.mxu0 %v1292
      %1513 = vmatpush.msra.mxu0 %v1290
      %1514 = vmatmul.f32.gmra.mxu0 %v992
      %v1515 = vpop.f32.mrf.mxu0
      %v1516 = vadd.f32 %v1456, %v1515
      %1517 = vdwg.mxu0
      %1518 = vmatpush.msra.mxu0 %v1352
      %1519 = vmatpush.msra.mxu0 %v1350
      %1520 = vmatpush.msra.mxu0 %v1348
      %1521 = vmatpush.msra.mxu0 %v1346
      %1522 = vmatpush.msra.mxu0 %v1344
      %1523 = vmatpush.msra.mxu0 %v1342
      %1524 = vmatpush.msra.mxu0 %v1340
      %1525 = vmatpush.msra.mxu0 %v1338
      %1526 = vmatpush.msra.mxu0 %v1336
      %1527 = vmatpush.msra.mxu0 %v1334
      %1528 = vmatpush.msra.mxu0 %v1332
      %1529 = vmatpush.msra.mxu0 %v1330
      %1530 = vmatpush.msra.mxu0 %v1328
      %1531 = vmatpush.msra.mxu0 %v1326
      %1532 = vmatpush.msra.mxu0 %v1324
      %1533 = vmatpush.msra.mxu0 %v1322
      %1534 = vmatmul.f32.gmra.mxu0 %v993
      %v1535 = vpop.f32.mrf.mxu0
      %v1536 = vadd.f32 %v1516, %v1535
      %1537 = vdwg.mxu0
      %1538 = vmatpush.msra.mxu0 %v1321
      %1539 = vmatpush.msra.mxu0 %v1319
      %1540 = vmatpush.msra.mxu0 %v1317
      %1541 = vmatpush.msra.mxu0 %v1315
      %1542 = vmatpush.msra.mxu0 %v1313
      %1543 = vmatpush.msra.mxu0 %v1311
      %1544 = vmatpush.msra.mxu0 %v1309
      %1545 = vmatpush.msra.mxu0 %v1307
      %1546 = vmatpush.msra.mxu0 %v1305
      %1547 = vmatpush.msra.mxu0 %v1303
      %1548 = vmatpush.msra.mxu0 %v1301
      %1549 = vmatpush.msra.mxu0 %v1299
      %1550 = vmatpush.msra.mxu0 %v1297
      %1551 = vmatpush.msra.mxu0 %v1295
      %1552 = vmatpush.msra.mxu0 %v1293
      %1553 = vmatpush.msra.mxu0 %v1291
      %1554 = vmatmul.f32.gmra.mxu0 %v992
      %v1555 = vpop.f32.mrf.mxu0
      %v1556 = vadd.f32 %v1496, %v1555
      %1557 = vdwg.mxu0
      %1558 = vmatpush.msra.mxu0 %v1353
      %1559 = vmatpush.msra.mxu0 %v1351
      %1560 = vmatpush.msra.mxu0 %v1349
      %1561 = vmatpush.msra.mxu0 %v1347
      %1562 = vmatpush.msra.mxu0 %v1345
      %1563 = vmatpush.msra.mxu0 %v1343
      %1564 = vmatpush.msra.mxu0 %v1341
      %1565 = vmatpush.msra.mxu0 %v1339
      %1566 = vmatpush.msra.mxu0 %v1337
      %1567 = vmatpush.msra.mxu0 %v1335
      %1568 = vmatpush.msra.mxu0 %v1333
      %1569 = vmatpush.msra.mxu0 %v1331
      %1570 = vmatpush.msra.mxu0 %v1329
      %1571 = vmatpush.msra.mxu0 %v1327
      %1572 = vmatpush.msra.mxu0 %v1325
      %1573 = vmatpush.msra.mxu0 %v1323
      %1574 = vmatmul.f32.gmra.mxu0 %v993
      %v1575 = vpop.f32.mrf.mxu0
      %v1576 = vadd.f32 %v1556, %v1575
      %1577 = vdwg.mxu0
      %v1578 = vld [vmem:[%s10] sm:$0x3]
      %v1580 = vperm.slane %v1578, 0
      %v1581 = vperm.slane %v1578, 1
      %v1584 = vadd.f32 %v1536, %v1580
      %v1585 = vadd.f32 %v1576, %v1581
      %v1586 = vld [vmem:[%s11] sm:$0x3]
      %v1588 = vperm.slane %v1586, 0
      %v1589 = vperm.slane %v1586, 1
      %v1592 = vmul.f32 %v1584, %v1588
      %v1593 = vmul.f32 %v1585, %v1589
      %v1594 = vld [vmem:[%s12] sm:$0x3]
      %v1596 = vperm.slane %v1594, 0
      %v1597 = vperm.slane %v1594, 1
      %v1600 = vadd.f32 %v1592, %v1596
      %v1601 = vadd.f32 %v1593, %v1597
      %v1602 = vxor.u32 %v1600, 2147483648
      %v1603 = vxor.u32 %v1601, 2147483648
      %v1604 = vmul.f32 %v1602, 1.442695
      %v1605 = vpow.pop %v1604
      %v1606 = vmul.f32 %v1603, 1.442695
      %v1607 = vpow.pop %v1606
      %v1608 = vadd.f32 %v1605, 1.0
      %v1609 = vadd.f32 %v1607, 1.0
      %v1610 = vrcp.pop %v1608
      %v1611 = vmul.f32 %v1608, %v1610
      %v1612 = vsub.f32 1.0, %v1611
      %v1613 = vmul.f32 %v1610, %v1612
      %v1614 = vadd.f32 %v1610, %v1613
      %vm1615 = vweird.f32 %v1608
      %vm1616 = vweird.f32 %v1610
      %vm1617 = vmor %vm1615, %vm1616
      %v1618 = vsel %vm1617, %v1610, %v1614
      %v1619 = vand.u32 2147483647, %v1608
      %vm1620 = vcmp.eq.f32.partialorder %v1619, 8.507059e+37
      %v1621 = vand.u32 %v1608, 2147483648
      %v1622 = vor.u32 1.1754944e-38, %v1621
      %v1623 = vsel %vm1620, %v1622, %v1618
      %v1624 = vmul.f32 1.0, %v1623
      %v1625 = vrcp.pop %v1609
      %v1626 = vmul.f32 %v1609, %v1625
      %v1627 = vsub.f32 1.0, %v1626
      %v1628 = vmul.f32 %v1625, %v1627
      %v1629 = vadd.f32 %v1625, %v1628
      %vm1630 = vweird.f32 %v1609
      %vm1631 = vweird.f32 %v1625
      %vm1632 = vmor %vm1630, %vm1631
      %v1633 = vsel %vm1632, %v1625, %v1629
      %v1634 = vand.u32 2147483647, %v1609
      %vm1635 = vcmp.eq.f32.partialorder %v1634, 8.507059e+37
      %v1636 = vand.u32 %v1609, 2147483648
      %v1637 = vor.u32 1.1754944e-38, %v1636
      %v1638 = vsel %vm1635, %v1637, %v1633
      %v1639 = vmul.f32 1.0, %v1638
      %v1640 = vmul.f32 %v1624, %v992
      %v1641 = vmul.f32 %v1639, %v993
      %v1642 = vsub.f32 1.0, %v1624
      %v1643 = vsub.f32 1.0, %v1639
      %v1644 = vmul.f32 %v1642, %v1288
      %v1645 = vmul.f32 %v1643, %v1289
      %v1646 = vadd.f32 %v1640, %v1644
      %v1647 = vadd.f32 %v1641, %v1645
      %v1648 = vadd.f32 %v1646, %v461
      %v1649 = vadd.f32 %v1647, %v462
      %1650 = vst [vmem:[%s460] sm:$0xff] %v1648
      %1651 = vst [vmem:[%s460 + $0x8] sm:$0xff] %v1649
      %p1652 = scmp.lt.s32.totalorder %s24, 1
      %s1653 = scalar_select %p1652, %s24, 1
      %s1654 = smul.addr %s1653, 2
      %s1655 = smul.addr %s1654, 8
      %s1656 = scalar_lea.vmem %s13, %s1655
      // Predicated region
      $region73: #{gcn_encoder_cell_forward.1} parent=71 // pred_check
        %p1657 = pneg %p325
      $region74: #{gcn_encoder_cell_forward.1} parent=71 // pred_check_branch
        %1659 = sbr.rel (%p1657) target = $region76
      $region75: #{gcn_encoder_cell_forward.1} parent=71 // pred_region
        _
      $region76: #{gcn_encoder_cell_forward.1} parent=71 // pred_fallthru
        _
    $region72: #{gcn_encoder_cell_forward.1} parent=5 // pred_fallthru
      _
    %p1660 = scmp.le.s32.totalorder 2, %s19
    // Predicated region
    $region77: #{gcn_encoder_cell_forward.1} parent=5 // pred_check
      %p1661 = pneg %p1660
    $region78: #{gcn_encoder_cell_forward.1} parent=5 // pred_check_branch
      %1663 = sbr.rel (%p1661) target = $region80
    $region79: #{gcn_encoder_cell_forward.1} parent=5 // pred_region
      %s1664 = ssub.s32 %s19, 2
      // Predicated region
      $region81: #{gcn_encoder_cell_forward.1} parent=79 // pred_check
        %p1665 = pneg %p331
      $region82: #{gcn_encoder_cell_forward.1} parent=79 // pred_check_branch
        %1667 = sbr.rel (%p1665) target = $region84
      $region83: #{gcn_encoder_cell_forward.1} parent=79 // pred_region
        %p1668 = scmp.lt.s32.totalorder %s25, 1
        %s1669 = scalar_select %p1668, %s25, 1
        %s1670 = smul.addr %s1669, 2
        %s1671 = smul.addr %s1670, 8
        %s1672 = scalar_lea.vmem %s13, %s1671
      $region84: #{gcn_encoder_cell_forward.1} parent=79 // pred_fallthru
        _
    $region80: #{gcn_encoder_cell_forward.1} parent=5 // pred_fallthru
      _
  $region6: #{gcn_encoder_cell_forward.1} parent=0 // loop_footer
    %s23 = sadd.s32 1, %s19
  $region7: #{gcn_encoder_cell_forward.1} parent=0 // loop_footer_branch
    %18 = sbr.rel target = $region3
  $region8: #{gcn_encoder_cell_forward.1} parent=0 // loop_exit
    _

</llo_original>
